<compile_context>
chip_gen: v6e
topology: v6e:2x2x1
jax: 0.10.0
libtpu: 0.0.40
codegen_flags: <defaults>
</compile_context>

<pallas_src>
import functools

import jax
import jax.numpy as jnp
from jax import lax
from jax.experimental import pallas as pl
from jax.experimental.pallas import tpu as pltpu

_HALO = 128  # lane-aligned zero halo on the flattened spatial axis (needs >= W + 1)


def _bottleneck_kernel(x_ref, s1_ref, t1_ref, w1_ref, b1_ref,
                       s2_ref, t2_ref, w2_ref, b2_ref,
                       o_ref, zpad_ref, *, H, W, C1, CIN, COUT):
    HW = H * W
    x = x_ref[...]                                                # (CIN, HW) f32

    # ---- bn1 + relu1 + 1x1 conv + bn2 + relu2 (spatial on lanes -> lane dense) ----
    a = jnp.maximum(x * s1_ref[...] + t1_ref[...], 0.0)           # (CIN, HW)
    y = jnp.dot(w1_ref[...], a, preferred_element_type=jnp.float32) + b1_ref[...]
    z = jnp.maximum(y * s2_ref[...] + t2_ref[...], 0.0)           # (C1, HW)

    # ---- 3x3 conv via an in-VMEM halo (no HBM pad round trip) ----
    # zpad layout along lanes: [ zero halo | z (flattened H*W) | zero halo ]
    zpad_ref[:, 0:_HALO] = jnp.zeros((C1, _HALO), jnp.float32)
    zpad_ref[:, _HALO + HW:2 * _HALO + HW] = jnp.zeros((C1, _HALO), jnp.float32)
    zpad_ref[:, _HALO:_HALO + HW] = z

    # Row-boundary masks: a flattened shift of dx = +-1 must not leak across rows.
    col = lax.broadcasted_iota(jnp.int32, (C1, HW), 1) % W
    not_first_col = col != 0           # valid output lanes for a dx = -1 tap
    not_last_col = col != W - 1        # valid output lanes for a dx = +1 tap

    acc = jnp.zeros((COUT, HW), jnp.float32)
    for ky in range(3):                # kernel rows (dy = ky - 1)
        dy = ky - 1
        dx_taps = []
        for kx in range(3):            # fold the dx taps into the contraction
            dx = kx - 1
            shift = dy * W + dx
            tap = zpad_ref[:, pl.ds(_HALO + shift, HW)]           # (C1, HW)
            if dx == -1:
                tap = jnp.where(not_first_col, tap, 0.0)
            elif dx == 1:
                tap = jnp.where(not_last_col, tap, 0.0)
            dx_taps.append(tap)
        patch = jnp.concatenate(dx_taps, axis=0)                  # (3*C1, HW)
        acc = acc + jnp.dot(w2_ref[ky], patch,
                            preferred_element_type=jnp.float32)
    out = acc + b2_ref[...]                                       # (COUT, HW)

    # ---- fused channel concat: [conv_out, x]  (already NCHW, lane-dense store) ----
    o_ref[0:COUT, :] = out.astype(o_ref.dtype)
    o_ref[COUT:COUT + CIN, :] = x.astype(o_ref.dtype)


def bottleneck_forward(x_nchw, params, eps=1e-5):
    N, CIN, H, W = x_nchw.shape
    HW = H * W
    C1 = params["w1"].shape[0]
    COUT = params["w2"].shape[0]
    assert W + 1 <= _HALO, "spatial width too large for the fixed halo"
    # TODO(synk): for large H*W, tile the spatial axis (with a row halo) instead of
    # holding one whole image per grid step.

    # Fold BatchNorm (inference mode) into per-channel scale/shift.
    s1 = params["gamma1"] / jnp.sqrt(params["var1"] + eps)
    t1 = params["beta1"] - params["mean1"] * s1
    s2 = params["gamma2"] / jnp.sqrt(params["var2"] + eps)
    t2 = params["beta2"] - params["mean2"] * s2

    w1 = params["w1"][:, :, 0, 0]                                  # (C1, CIN)
    # conv2 weight (COUT, C1, 3, 3) -> (ky, COUT, kx*C1 + c)  (dx folded into K)
    w2r = jnp.transpose(params["w2"], (2, 0, 3, 1)).reshape(3, COUT, 3 * C1)

    x2 = x_nchw.reshape(N, CIN, HW).astype(jnp.float32)            # free reshape, no transpose

    kern = functools.partial(_bottleneck_kernel, H=H, W=W, C1=C1, CIN=CIN, COUT=COUT)
    out = pl.pallas_call(
        kern,
        out_shape=jax.ShapeDtypeStruct((N, COUT + CIN, HW), jnp.float32),
        grid=(N,),
        in_specs=[
            pl.BlockSpec((None, CIN, HW), lambda n: (n, 0, 0)),    # x (one image)
            pl.BlockSpec((CIN, 1), lambda n: (0, 0)),              # bn1 scale
            pl.BlockSpec((CIN, 1), lambda n: (0, 0)),              # bn1 shift
            pl.BlockSpec((C1, CIN), lambda n: (0, 0)),             # conv1 weight
            pl.BlockSpec((C1, 1), lambda n: (0, 0)),               # conv1 bias
            pl.BlockSpec((C1, 1), lambda n: (0, 0)),               # bn2 scale
            pl.BlockSpec((C1, 1), lambda n: (0, 0)),               # bn2 shift
            pl.BlockSpec((3, COUT, 3 * C1), lambda n: (0, 0, 0)),  # conv2 weight (folded)
            pl.BlockSpec((COUT, 1), lambda n: (0, 0)),             # conv2 bias
        ],
        out_specs=pl.BlockSpec((None, COUT + CIN, HW), lambda n: (n, 0, 0)),
        scratch_shapes=[pltpu.VMEM((C1, HW + 2 * _HALO), jnp.float32)],
        compiler_params=pltpu.CompilerParams(
            dimension_semantics=("parallel",),
            vmem_limit_bytes=32 * 1024 * 1024,
        ),
    )(x2, s1[:, None], t1[:, None], w1, params["b1"][:, None],
      s2[:, None], t2[:, None], w2r, params["b2"][:, None])

    return out.reshape(N, COUT + CIN, H, W)


# Pure-JAX reference (same folded-BN semantics) for the correctness check.
def bottleneck_reference(x_nchw, params, eps=1e-5):
    x = jnp.transpose(x_nchw, (0, 2, 3, 1)).astype(jnp.float32)
    s1 = params["gamma1"] / jnp.sqrt(params["var1"] + eps)
    t1 = params["beta1"] - params["mean1"] * s1
    s2 = params["gamma2"] / jnp.sqrt(params["var2"] + eps)
    t2 = params["beta2"] - params["mean2"] * s2
    a = jnp.maximum(x * s1 + t1, 0.0)
    w1 = jnp.transpose(params["w1"], (2, 3, 1, 0))                 # HWIO
    y = lax.conv_general_dilated(a, w1, (1, 1), "VALID",
                                 dimension_numbers=("NHWC", "HWIO", "NHWC"))
    y = y + params["b1"]
    y = jnp.maximum(y * s2 + t2, 0.0)
    w2 = jnp.transpose(params["w2"], (2, 3, 1, 0))
    z = lax.conv_general_dilated(y, w2, (1, 1), ((1, 1), (1, 1)),
                                 dimension_numbers=("NHWC", "HWIO", "NHWC"))
    z = z + params["b2"]
    z_nchw = jnp.transpose(z, (0, 3, 1, 2))
    return jnp.concatenate([z_nchw, x_nchw.astype(jnp.float32)], axis=1)


def init_params(key, in_planes, growth_rate):
    c1 = 4 * growth_rate
    ks = jax.random.split(key, 8)
    return {
        "gamma1": jax.random.uniform(ks[0], (in_planes,), jnp.float32, 0.5, 1.5),
        "beta1": jax.random.normal(ks[1], (in_planes,), jnp.float32) * 0.1,
        "mean1": jax.random.normal(ks[2], (in_planes,), jnp.float32) * 0.1,
        "var1": jax.random.uniform(ks[3], (in_planes,), jnp.float32, 0.5, 1.5),
        "w1": jax.random.normal(ks[4], (c1, in_planes, 1, 1), jnp.float32) * 0.1,
        "b1": jax.random.normal(ks[5], (c1,), jnp.float32) * 0.1,
        "gamma2": jax.random.uniform(ks[6], (c1,), jnp.float32, 0.5, 1.5),
        "beta2": jax.random.normal(ks[7], (c1,), jnp.float32) * 0.1,
        "mean2": jnp.linspace(-0.1, 0.1, c1).astype(jnp.float32),
        "var2": jnp.linspace(0.5, 1.5, c1).astype(jnp.float32),
        "w2": jax.random.normal(jax.random.PRNGKey(42), (growth_rate, c1, 3, 3),
                                jnp.float32) * 0.1,
        "b2": jax.random.normal(jax.random.PRNGKey(43), (growth_rate,),
                                jnp.float32) * 0.1,
    }


if __name__ == "__main__":
    key = jax.random.PRNGKey(0)
    N, in_planes, H, W = 2, 16, 16, 16
    growth_rate = 8

    kx, kp = jax.random.split(key)
    x = jax.random.normal(kx, (N, in_planes, H, W), jnp.float32)
    params = init_params(kp, in_planes, growth_rate)

    out = jax.block_until_ready(bottleneck_forward(x, params))
    ref = jax.block_until_ready(bottleneck_reference(x, params))

    assert out.shape == (N, growth_rate + in_planes, H, W), out.shape
    max_err = float(jnp.max(jnp.abs(out - ref)))
    assert jnp.allclose(out, ref, rtol=1e-3, atol=1e-3), max_err
    print("KERNEL_OK")
</pallas_src>

<mosaic_0001>
module attributes {stable_mosaic.version = 11 : i64} {
  func.func @_bottleneck_kernel(%arg0: i32, %arg1: memref<1x16x256xf32, #tpu.memory_space<vmem>>, %arg2: memref<16x1xf32, #tpu.memory_space<vmem>>, %arg3: memref<16x1xf32, #tpu.memory_space<vmem>>, %arg4: memref<32x16xf32, #tpu.memory_space<vmem>>, %arg5: memref<32x1xf32, #tpu.memory_space<vmem>>, %arg6: memref<32x1xf32, #tpu.memory_space<vmem>>, %arg7: memref<32x1xf32, #tpu.memory_space<vmem>>, %arg8: memref<3x8x96xf32, #tpu.memory_space<vmem>>, %arg9: memref<8x1xf32, #tpu.memory_space<vmem>>, %arg10: memref<1x24x256xf32, #tpu.memory_space<vmem>>, %arg11: memref<32x512xf32, #tpu.memory_space<vmem>>) attributes {dimension_semantics = [#tpu.dimension_semantics<parallel>], iteration_bounds = array<i64: 2>, scalar_prefetch = 0 : i64, scratch_operands = 1 : i64, tpu.core_type = #tpu.core_type<tc>, window_params = [{transform_indices = @transform_0, window_bounds = array<i64: 1, 16, 256>}, {pipeline_mode = #tpu.pipeline_mode<synchronous>, transform_indices = @transform_1, window_bounds = array<i64: 16, 1>}, {pipeline_mode = #tpu.pipeline_mode<synchronous>, transform_indices = @transform_2, window_bounds = array<i64: 16, 1>}, {pipeline_mode = #tpu.pipeline_mode<synchronous>, transform_indices = @transform_3, window_bounds = array<i64: 32, 16>}, {pipeline_mode = #tpu.pipeline_mode<synchronous>, transform_indices = @transform_4, window_bounds = array<i64: 32, 1>}, {pipeline_mode = #tpu.pipeline_mode<synchronous>, transform_indices = @transform_5, window_bounds = array<i64: 32, 1>}, {pipeline_mode = #tpu.pipeline_mode<synchronous>, transform_indices = @transform_6, window_bounds = array<i64: 32, 1>}, {pipeline_mode = #tpu.pipeline_mode<synchronous>, transform_indices = @transform_7, window_bounds = array<i64: 3, 8, 96>}, {pipeline_mode = #tpu.pipeline_mode<synchronous>, transform_indices = @transform_8, window_bounds = array<i64: 8, 1>}, {transform_indices = @transform_9, window_bounds = array<i64: 1, 24, 256>}]} {
    %c0 = arith.constant 0 : index
    %c0_0 = arith.constant 0 : index
    %c0_1 = arith.constant 0 : index
    %0 = vector.load %arg1[%c0, %c0_0, %c0_1] : memref<1x16x256xf32, #tpu.memory_space<vmem>>, vector<1x16x256xf32>
    %1 = vector.shape_cast %0 : vector<1x16x256xf32> to vector<16x256xf32>
    %c0_2 = arith.constant 0 : index
    %c0_3 = arith.constant 0 : index
    %2 = vector.load %arg2[%c0_2, %c0_3] : memref<16x1xf32, #tpu.memory_space<vmem>>, vector<16x1xf32>
    %3 = vector.broadcast %2 : vector<16x1xf32> to vector<16x256xf32>
    %4 = arith.mulf %1, %3 : vector<16x256xf32>
    %c0_4 = arith.constant 0 : index
    %c0_5 = arith.constant 0 : index
    %5 = vector.load %arg3[%c0_4, %c0_5] : memref<16x1xf32, #tpu.memory_space<vmem>>, vector<16x1xf32>
    %6 = vector.broadcast %5 : vector<16x1xf32> to vector<16x256xf32>
    %7 = arith.addf %4, %6 : vector<16x256xf32>
    %cst = arith.constant 0.000000e+00 : f32
    %8 = vector.broadcast %cst : f32 to vector<16x256xf32>
    %9 = arith.maximumf %7, %8 : vector<16x256xf32>
    %c0_6 = arith.constant 0 : index
    %c0_7 = arith.constant 0 : index
    %10 = vector.load %arg4[%c0_6, %c0_7] : memref<32x16xf32, #tpu.memory_space<vmem>>, vector<32x16xf32>
    %cst_8 = arith.constant dense<0.000000e+00> : vector<32x256xf32>
    %11 = tpu.matmul %10, %9, %cst_8 {dimension_numbers = #tpu.dot_dimension_numbers<[1], [0], [0], [1], [0, 0, 1, 1], [], []>} : vector<32x16xf32>, vector<16x256xf32>, vector<32x256xf32> -> vector<32x256xf32>
    %c0_9 = arith.constant 0 : index
    %c0_10 = arith.constant 0 : index
    %12 = vector.load %arg5[%c0_9, %c0_10] : memref<32x1xf32, #tpu.memory_space<vmem>>, vector<32x1xf32>
    %13 = vector.broadcast %12 : vector<32x1xf32> to vector<32x256xf32>
    %14 = arith.addf %11, %13 : vector<32x256xf32>
    %c0_11 = arith.constant 0 : index
    %c0_12 = arith.constant 0 : index
    %15 = vector.load %arg6[%c0_11, %c0_12] : memref<32x1xf32, #tpu.memory_space<vmem>>, vector<32x1xf32>
    %16 = vector.broadcast %15 : vector<32x1xf32> to vector<32x256xf32>
    %17 = arith.mulf %14, %16 : vector<32x256xf32>
    %c0_13 = arith.constant 0 : index
    %c0_14 = arith.constant 0 : index
    %18 = vector.load %arg7[%c0_13, %c0_14] : memref<32x1xf32, #tpu.memory_space<vmem>>, vector<32x1xf32>
    %19 = vector.broadcast %18 : vector<32x1xf32> to vector<32x256xf32>
    %20 = arith.addf %17, %19 : vector<32x256xf32>
    %cst_15 = arith.constant 0.000000e+00 : f32
    %21 = vector.broadcast %cst_15 : f32 to vector<32x256xf32>
    %22 = arith.maximumf %20, %21 : vector<32x256xf32>
    %cst_16 = arith.constant 0.000000e+00 : f32
    %23 = vector.broadcast %cst_16 : f32 to vector<32x128xf32>
    %c0_17 = arith.constant 0 : index
    %c0_18 = arith.constant 0 : index
    %24 = vector.load %arg11[%c0_17, %c0_18] : memref<32x512xf32, #tpu.memory_space<vmem>>, vector<32x128xf32>
    tpu.vector_store %arg11[%c0_17, %c0_18], %23 {strides = array<i32>} : memref<32x512xf32, #tpu.memory_space<vmem>>, vector<32x128xf32>,
    %cst_19 = arith.constant 0.000000e+00 : f32
    %25 = vector.broadcast %cst_19 : f32 to vector<32x128xf32>
    %c0_20 = arith.constant 0 : index
    %c384 = arith.constant 384 : index
    %26 = vector.load %arg11[%c0_20, %c384] : memref<32x512xf32, #tpu.memory_space<vmem>>, vector<32x128xf32>
    tpu.vector_store %arg11[%c0_20, %c384], %25 {strides = array<i32>} : memref<32x512xf32, #tpu.memory_space<vmem>>, vector<32x128xf32>,
    %c0_21 = arith.constant 0 : index
    %c128 = arith.constant 128 : index
    %27 = vector.load %arg11[%c0_21, %c128] : memref<32x512xf32, #tpu.memory_space<vmem>>, vector<32x256xf32>
    tpu.vector_store %arg11[%c0_21, %c128], %22 {strides = array<i32>} : memref<32x512xf32, #tpu.memory_space<vmem>>, vector<32x256xf32>,
    %28 = tpu.iota {dimensions = array<i32: 1>} : vector<32x256xi32>
    %c16_i32 = arith.constant 16 : i32
    %c0_i32 = arith.constant 0 : i32
    %29 = arith.cmpi eq, %c16_i32, %c0_i32 : i32
    %c1_i32 = arith.constant 1 : i32
    %30 = arith.select %29, %c1_i32, %c16_i32 : i32
    %31 = vector.broadcast %30 : i32 to vector<32x256xi32>
    %32 = arith.remsi %28, %31 : vector<32x256xi32>
    %c0_i32_22 = arith.constant 0 : i32
    %33 = vector.broadcast %c0_i32_22 : i32 to vector<32x256xi32>
    %34 = arith.cmpi ne, %32, %33 : vector<32x256xi32>
    %c0_i32_23 = arith.constant 0 : i32
    %35 = vector.broadcast %c0_i32_23 : i32 to vector<32x256xi32>
    %36 = arith.cmpi slt, %32, %35 : vector<32x256xi32>
    %c0_i32_24 = arith.constant 0 : i32
    %37 = arith.cmpi slt, %30, %c0_i32_24 : i32
    %38 = vector.broadcast %37 : i1 to vector<32x256xi1>
    %39 = vector.broadcast %38 : vector<32x256xi1> to vector<32x256xi1>
    %40 = arith.xori %36, %39 : vector<32x256xi1>
    %41 = arith.andi %40, %34 : vector<32x256xi1>
    %42 = vector.broadcast %30 : i32 to vector<32x256xi32>
    %43 = arith.addi %32, %42 : vector<32x256xi32>
    %44 = arith.select %41, %43, %32 : vector<32x256xi1>, vector<32x256xi32>
    %c0_i32_25 = arith.constant 0 : i32
    %45 = vector.broadcast %c0_i32_25 : i32 to vector<32x256xi32>
    %46 = arith.cmpi ne, %44, %45 : vector<32x256xi32>
    %c15_i32 = arith.constant 15 : i32
    %47 = vector.broadcast %c15_i32 : i32 to vector<32x256xi32>
    %48 = arith.cmpi ne, %44, %47 : vector<32x256xi32>
    %cst_26 = arith.constant 0.000000e+00 : f32
    %49 = vector.broadcast %cst_26 : f32 to vector<8x256xf32>
    %c0_27 = arith.constant 0 : index
    %c111 = arith.constant 111 : index
    %50 = vector.load %arg11[%c0_27, %c111] : memref<32x512xf32, #tpu.memory_space<vmem>>, vector<32x256xf32>
    %cst_28 = arith.constant 0.000000e+00 : f32
    %51 = vector.broadcast %cst_28 : f32 to vector<32x256xf32>
    %52 = arith.select %46, %50, %51 : vector<32x256xi1>, vector<32x256xf32>
    %c0_29 = arith.constant 0 : index
    %c112 = arith.constant 112 : index
    %53 = vector.load %arg11[%c0_29, %c112] : memref<32x512xf32, #tpu.memory_space<vmem>>, vector<32x256xf32>
    %c0_30 = arith.constant 0 : index
    %c113 = arith.constant 113 : index
    %54 = vector.load %arg11[%c0_30, %c113] : memref<32x512xf32, #tpu.memory_space<vmem>>, vector<32x256xf32>
    %cst_31 = arith.constant 0.000000e+00 : f32
    %55 = vector.broadcast %cst_31 : f32 to vector<32x256xf32>
    %56 = arith.select %48, %54, %55 : vector<32x256xi1>, vector<32x256xf32>
    %57 = tpu.concatenate %52, %53, %56 in 0 : vector<32x256xf32>, vector<32x256xf32>, vector<32x256xf32> -> vector<96x256xf32>
    %c0_32 = arith.constant 0 : index
    %c0_33 = arith.constant 0 : index
    %c0_34 = arith.constant 0 : index
    %58 = vector.load %arg8[%c0_32, %c0_33, %c0_34] : memref<3x8x96xf32, #tpu.memory_space<vmem>>, vector<1x8x96xf32>
    %59 = vector.shape_cast %58 : vector<1x8x96xf32> to vector<8x96xf32>
    %cst_35 = arith.constant dense<0.000000e+00> : vector<8x256xf32>
    %60 = tpu.matmul %59, %57, %cst_35 {dimension_numbers = #tpu.dot_dimension_numbers<[1], [0], [0], [1], [0, 0, 1, 1], [], []>} : vector<8x96xf32>, vector<96x256xf32>, vector<8x256xf32> -> vector<8x256xf32>
    %61 = arith.addf %49, %60 : vector<8x256xf32>
    %c0_36 = arith.constant 0 : index
    %c127 = arith.constant 127 : index
    %62 = vector.load %arg11[%c0_36, %c127] : memref<32x512xf32, #tpu.memory_space<vmem>>, vector<32x256xf32>
    %cst_37 = arith.constant 0.000000e+00 : f32
    %63 = vector.broadcast %cst_37 : f32 to vector<32x256xf32>
    %64 = arith.select %46, %62, %63 : vector<32x256xi1>, vector<32x256xf32>
    %c0_38 = arith.constant 0 : index
    %c128_39 = arith.constant 128 : index
    %65 = vector.load %arg11[%c0_38, %c128_39] : memref<32x512xf32, #tpu.memory_space<vmem>>, vector<32x256xf32>
    %c0_40 = arith.constant 0 : index
    %c129 = arith.constant 129 : index
    %66 = vector.load %arg11[%c0_40, %c129] : memref<32x512xf32, #tpu.memory_space<vmem>>, vector<32x256xf32>
    %cst_41 = arith.constant 0.000000e+00 : f32
    %67 = vector.broadcast %cst_41 : f32 to vector<32x256xf32>
    %68 = arith.select %48, %66, %67 : vector<32x256xi1>, vector<32x256xf32>
    %69 = tpu.concatenate %64, %65, %68 in 0 : vector<32x256xf32>, vector<32x256xf32>, vector<32x256xf32> -> vector<96x256xf32>
    %c1 = arith.constant 1 : index
    %c0_42 = arith.constant 0 : index
    %c0_43 = arith.constant 0 : index
    %70 = vector.load %arg8[%c1, %c0_42, %c0_43] : memref<3x8x96xf32, #tpu.memory_space<vmem>>, vector<1x8x96xf32>
    %71 = vector.shape_cast %70 : vector<1x8x96xf32> to vector<8x96xf32>
    %cst_44 = arith.constant dense<0.000000e+00> : vector<8x256xf32>
    %72 = tpu.matmul %71, %69, %cst_44 {dimension_numbers = #tpu.dot_dimension_numbers<[1], [0], [0], [1], [0, 0, 1, 1], [], []>} : vector<8x96xf32>, vector<96x256xf32>, vector<8x256xf32> -> vector<8x256xf32>
    %73 = arith.addf %61, %72 : vector<8x256xf32>
    %c0_45 = arith.constant 0 : index
    %c143 = arith.constant 143 : index
    %74 = vector.load %arg11[%c0_45, %c143] : memref<32x512xf32, #tpu.memory_space<vmem>>, vector<32x256xf32>
    %cst_46 = arith.constant 0.000000e+00 : f32
    %75 = vector.broadcast %cst_46 : f32 to vector<32x256xf32>
    %76 = arith.select %46, %74, %75 : vector<32x256xi1>, vector<32x256xf32>
    %c0_47 = arith.constant 0 : index
    %c144 = arith.constant 144 : index
    %77 = vector.load %arg11[%c0_47, %c144] : memref<32x512xf32, #tpu.memory_space<vmem>>, vector<32x256xf32>
    %c0_48 = arith.constant 0 : index
    %c145 = arith.constant 145 : index
    %78 = vector.load %arg11[%c0_48, %c145] : memref<32x512xf32, #tpu.memory_space<vmem>>, vector<32x256xf32>
    %cst_49 = arith.constant 0.000000e+00 : f32
    %79 = vector.broadcast %cst_49 : f32 to vector<32x256xf32>
    %80 = arith.select %48, %78, %79 : vector<32x256xi1>, vector<32x256xf32>
    %81 = tpu.concatenate %76, %77, %80 in 0 : vector<32x256xf32>, vector<32x256xf32>, vector<32x256xf32> -> vector<96x256xf32>
    %c2 = arith.constant 2 : index
    %c0_50 = arith.constant 0 : index
    %c0_51 = arith.constant 0 : index
    %82 = vector.load %arg8[%c2, %c0_50, %c0_51] : memref<3x8x96xf32, #tpu.memory_space<vmem>>, vector<1x8x96xf32>
    %83 = vector.shape_cast %82 : vector<1x8x96xf32> to vector<8x96xf32>
    %cst_52 = arith.constant dense<0.000000e+00> : vector<8x256xf32>
    %84 = tpu.matmul %83, %81, %cst_52 {dimension_numbers = #tpu.dot_dimension_numbers<[1], [0], [0], [1], [0, 0, 1, 1], [], []>} : vector<8x96xf32>, vector<96x256xf32>, vector<8x256xf32> -> vector<8x256xf32>
    %85 = arith.addf %73, %84 : vector<8x256xf32>
    %c0_53 = arith.constant 0 : index
    %c0_54 = arith.constant 0 : index
    %86 = vector.load %arg9[%c0_53, %c0_54] : memref<8x1xf32, #tpu.memory_space<vmem>>, vector<8x1xf32>
    %87 = vector.broadcast %86 : vector<8x1xf32> to vector<8x256xf32>
    %88 = arith.addf %85, %87 : vector<8x256xf32>
    %c0_55 = arith.constant 0 : index
    %c0_56 = arith.constant 0 : index
    %c0_57 = arith.constant 0 : index
    %89 = vector.load %arg10[%c0_55, %c0_56, %c0_57] : memref<1x24x256xf32, #tpu.memory_space<vmem>>, vector<1x8x256xf32>
    %90 = vector.shape_cast %89 : vector<1x8x256xf32> to vector<8x256xf32>
    %91 = vector.shape_cast %88 : vector<8x256xf32> to vector<1x8x256xf32>
    tpu.vector_store %arg10[%c0_55, %c0_56, %c0_57], %91 {strides = array<i32>} : memref<1x24x256xf32, #tpu.memory_space<vmem>>, vector<1x8x256xf32>,
    %c0_58 = arith.constant 0 : index
    %c8 = arith.constant 8 : index
    %c0_59 = arith.constant 0 : index
    %92 = vector.load %arg10[%c0_58, %c8, %c0_59] : memref<1x24x256xf32, #tpu.memory_space<vmem>>, vector<1x16x256xf32>
    %93 = vector.shape_cast %92 : vector<1x16x256xf32> to vector<16x256xf32>
    %94 = vector.shape_cast %1 : vector<16x256xf32> to vector<1x16x256xf32>
    tpu.vector_store %arg10[%c0_58, %c8, %c0_59], %94 {strides = array<i32>} : memref<1x24x256xf32, #tpu.memory_space<vmem>>, vector<1x16x256xf32>,
    return
  }
  func.func @transform_0(%arg0: i32) -> (i32, i32, i32) {
    %c0_i32 = arith.constant 0 : i32
    %c0_i32_0 = arith.constant 0 : i32
    %c0_i32_1 = arith.constant 0 : i32
    return %arg0, %c0_i32, %c0_i32_0 : i32, i32, i32
  }
  func.func @transform_1(%arg0: i32) -> (i32, i32) {
    %c0_i32 = arith.constant 0 : i32
    %c0_i32_0 = arith.constant 0 : i32
    %c0_i32_1 = arith.constant 0 : i32
    return %c0_i32, %c0_i32_0 : i32, i32
  }
  func.func @transform_2(%arg0: i32) -> (i32, i32) {
    %c0_i32 = arith.constant 0 : i32
    %c0_i32_0 = arith.constant 0 : i32
    %c0_i32_1 = arith.constant 0 : i32
    return %c0_i32, %c0_i32_0 : i32, i32
  }
  func.func @transform_3(%arg0: i32) -> (i32, i32) {
    %c0_i32 = arith.constant 0 : i32
    %c0_i32_0 = arith.constant 0 : i32
    %c0_i32_1 = arith.constant 0 : i32
    return %c0_i32, %c0_i32_0 : i32, i32
  }
  func.func @transform_4(%arg0: i32) -> (i32, i32) {
    %c0_i32 = arith.constant 0 : i32
    %c0_i32_0 = arith.constant 0 : i32
    %c0_i32_1 = arith.constant 0 : i32
    return %c0_i32, %c0_i32_0 : i32, i32
  }
  func.func @transform_5(%arg0: i32) -> (i32, i32) {
    %c0_i32 = arith.constant 0 : i32
    %c0_i32_0 = arith.constant 0 : i32
    %c0_i32_1 = arith.constant 0 : i32
    return %c0_i32, %c0_i32_0 : i32, i32
  }
  func.func @transform_6(%arg0: i32) -> (i32, i32) {
    %c0_i32 = arith.constant 0 : i32
    %c0_i32_0 = arith.constant 0 : i32
    %c0_i32_1 = arith.constant 0 : i32
    return %c0_i32, %c0_i32_0 : i32, i32
  }
  func.func @transform_7(%arg0: i32) -> (i32, i32, i32) {
    %c0_i32 = arith.constant 0 : i32
    %c0_i32_0 = arith.constant 0 : i32
    %c0_i32_1 = arith.constant 0 : i32
    %c0_i32_2 = arith.constant 0 : i32
    return %c0_i32, %c0_i32_0, %c0_i32_1 : i32, i32, i32
  }
  func.func @transform_8(%arg0: i32) -> (i32, i32) {
    %c0_i32 = arith.constant 0 : i32
    %c0_i32_0 = arith.constant 0 : i32
    %c0_i32_1 = arith.constant 0 : i32
    return %c0_i32, %c0_i32_0 : i32, i32
  }
  func.func @transform_9(%arg0: i32) -> (i32, i32, i32) {
    %c0_i32 = arith.constant 0 : i32
    %c0_i32_0 = arith.constant 0 : i32
    %c0_i32_1 = arith.constant 0 : i32
    return %arg0, %c0_i32, %c0_i32_0 : i32, i32, i32
  }
}

</mosaic_0001>

<llo_original>
// kernel: tpu_custom_call.1
$region0: #{tpu_custom_call.1}
  #allocation0 [shape = 'u32[]', space=smem, size = 0x4, offset = 0x4, fixed_abs, tag = 'smem constant byte address 0x4 - core index']
  #allocation1 [shape = 'u32[144,128]{1,0:T(1,128)}', space=vmem, size = 0x12000, scoped, tag = 'internal scratch']
  #allocation2 [shape = 'f32[32,512]{1,0:T(8,128)}', space=vmem, size = 0x10000, scoped, tag = 'scratch operand']
  %s0 = inlined_call_operand.vmem [shape: f32[2,16,256], index: 0, kind: input, shape index: {}]
  %s1 = inlined_call_operand.vmem [shape: f32[16,1], index: 1, kind: input, shape index: {}]
  %s2 = inlined_call_operand.vmem [shape: f32[16,1], index: 2, kind: input, shape index: {}]
  %s3 = inlined_call_operand.vmem [shape: f32[32,16], index: 3, kind: input, shape index: {}]
  %s4 = inlined_call_operand.vmem [shape: f32[32,1], index: 4, kind: input, shape index: {}]
  %s5 = inlined_call_operand.vmem [shape: f32[32,1], index: 5, kind: input, shape index: {}]
  %s6 = inlined_call_operand.vmem [shape: f32[32,1], index: 6, kind: input, shape index: {}]
  %s7 = inlined_call_operand.vmem [shape: f32[3,8,96], index: 7, kind: input, shape index: {}]
  %s8 = inlined_call_operand.vmem [shape: f32[8,1], index: 8, kind: input, shape index: {}]
  %s9 = inlined_call_operand.hbm [shape: f32[2,24,256], index: 9, kind: output, shape index: {}]
  %s10 = sld [smem:[#allocation0]]
  $region69: #{tpu_custom_call.1} parent=0
    _
  %s12 = ssub.s32 1, %s10
  %s13 = scalar_select 0, %s12, %s10
  $region1: #{tpu_custom_call.1} parent=0
    #allocation3 [shape = 'u8[49152]{0}', space=vmem, size = 0xc000, scoped, tag = 'output window, operand 0']
    #allocation4 [shape = 's32[2]{0}', space=sflag, size = 0x8, scoped, tag = 'scoped memory for tpu_custom_call.1']
    %14 = vsyncpa [#allocation4], 0
    %s15 = scalar_lea.sflag [#allocation4], 1
    %16 = vsyncpa %s15, 0
    loop: start=0, step=1, limit=4
    $region2: #{tpu_custom_call.1} parent=1 // loop_pre_header
      _
    $region3: #{tpu_custom_call.1} parent=1 // loop_header
      %s18 = sphi 0, %s22
      %p19 = scmp.ge.s32.totalorder %s18, 4
      %s28 = sphi 0, %s30
      %s31 = sphi 0, %s28
      %s32 = sphi 0, %s31
      %s48 = sphi 0, %s32
      %s52 = sphi 0, %s52
      %s54 = sphi 0, %s52
      %s55 = sphi 0, %s54
      %s69 = sphi 0, %s55
      %s73 = sphi 0, %s73
      %s75 = sphi 0, %s73
      %s76 = sphi 0, %s75
      %s90 = sphi 0, %s76
      %s94 = sphi 0, %s94
      %s96 = sphi 0, %s94
      %s97 = sphi 0, %s96
      %s111 = sphi 0, %s97
      %s115 = sphi 0, %s115
      %s117 = sphi 0, %s115
      %s118 = sphi 0, %s117
      %s132 = sphi 0, %s118
      %s136 = sphi 0, %s136
      %s138 = sphi 0, %s136
      %s139 = sphi 0, %s138
      %s153 = sphi 0, %s139
      %s157 = sphi 0, %s157
      %s159 = sphi 0, %s157
      %s160 = sphi 0, %s159
      %s174 = sphi 0, %s160
      %s178 = sphi 0, %s178
      %s180 = sphi 0, %s178
      %s181 = sphi 0, %s180
      %s195 = sphi 0, %s181
      %s199 = sphi 0, %s199
      %s201 = sphi 0, %s199
      %s202 = sphi 0, %s201
      %s216 = sphi 0, %s202
      %s222 = sphi 0, %s224
      %s225 = sphi 0, %s222
      %s226 = sphi 0, %s225
      %s242 = sphi 0, %s226
    $region4: #{tpu_custom_call.1} parent=1 // loop_header_branch
      %21 = sbr.rel (%p19) target = $region8
    $region5: #{tpu_custom_call.1} parent=1 // loop_body
      %s23 = ssub.s32 %s18, 1
      %s24 = ssub.s32 %s18, 2
      %s25 = sadd.s32 %s18, 1
      %s26 = ssub.s32 %s18, %s25
      %p27 = scmp.eq.s32.totalorder %s26, 0
      %s29 = sadd.s32 %s28, 1
      %s30 = scalar_select %p27, %s28, %s29
      %p33 = pneg %p27
      %p34 = scmp.eq.s32.totalorder %s18, 1
      %p35 = por %p33, %p34
      %p36 = scmp.ne.s32.totalorder %s28, %s31
      %p37 = scmp.eq.s32.totalorder %s18, 0
      %p38 = por %p36, %p37
      %p39 = scmp.ne.s32.totalorder %s28, %s31
      %p40 = scmp.eq.s32.totalorder %s23, 1
      %p41 = por %p39, %p40
      %p42 = scmp.ne.s32.totalorder %s31, %s32
      %p43 = scmp.eq.s32.totalorder %s23, 0
      %p44 = por %p42, %p43
      %p45 = scmp.ne.s32.totalorder %s31, %s32
      %p46 = scmp.eq.s32.totalorder %s24, 1
      %p47 = por %p45, %p46
      %p49 = scmp.ne.s32.totalorder %s32, %s48
      %p50 = scmp.eq.s32.totalorder %s24, 0
      %p51 = por %p49, %p50
      %s53 = sadd.s32 %s52, 1
      %p56 = scmp.eq.s32.totalorder %s18, 1
      %p57 = scmp.ne.s32.totalorder %s52, %s54
      %p58 = scmp.eq.s32.totalorder %s18, 0
      %p59 = por %p57, %p58
      %p60 = scmp.ne.s32.totalorder %s52, %s54
      %p61 = scmp.eq.s32.totalorder %s23, 1
      %p62 = por %p60, %p61
      %p63 = scmp.ne.s32.totalorder %s54, %s55
      %p64 = scmp.eq.s32.totalorder %s23, 0
      %p65 = por %p63, %p64
      %p66 = scmp.ne.s32.totalorder %s54, %s55
      %p67 = scmp.eq.s32.totalorder %s24, 1
      %p68 = por %p66, %p67
      %p70 = scmp.ne.s32.totalorder %s55, %s69
      %p71 = scmp.eq.s32.totalorder %s24, 0
      %p72 = por %p70, %p71
      %s74 = sadd.s32 %s73, 1
      %p77 = scmp.eq.s32.totalorder %s18, 1
      %p78 = scmp.ne.s32.totalorder %s73, %s75
      %p79 = scmp.eq.s32.totalorder %s18, 0
      %p80 = por %p78, %p79
      %p81 = scmp.ne.s32.totalorder %s73, %s75
      %p82 = scmp.eq.s32.totalorder %s23, 1
      %p83 = por %p81, %p82
      %p84 = scmp.ne.s32.totalorder %s75, %s76
      %p85 = scmp.eq.s32.totalorder %s23, 0
      %p86 = por %p84, %p85
      %p87 = scmp.ne.s32.totalorder %s75, %s76
      %p88 = scmp.eq.s32.totalorder %s24, 1
      %p89 = por %p87, %p88
      %p91 = scmp.ne.s32.totalorder %s76, %s90
      %p92 = scmp.eq.s32.totalorder %s24, 0
      %p93 = por %p91, %p92
      %s95 = sadd.s32 %s94, 1
      %p98 = scmp.eq.s32.totalorder %s18, 1
      %p99 = scmp.ne.s32.totalorder %s94, %s96
      %p100 = scmp.eq.s32.totalorder %s18, 0
      %p101 = por %p99, %p100
      %p102 = scmp.ne.s32.totalorder %s94, %s96
      %p103 = scmp.eq.s32.totalorder %s23, 1
      %p104 = por %p102, %p103
      %p105 = scmp.ne.s32.totalorder %s96, %s97
      %p106 = scmp.eq.s32.totalorder %s23, 0
      %p107 = por %p105, %p106
      %p108 = scmp.ne.s32.totalorder %s96, %s97
      %p109 = scmp.eq.s32.totalorder %s24, 1
      %p110 = por %p108, %p109
      %p112 = scmp.ne.s32.totalorder %s97, %s111
      %p113 = scmp.eq.s32.totalorder %s24, 0
      %p114 = por %p112, %p113
      %s116 = sadd.s32 %s115, 1
      %p119 = scmp.eq.s32.totalorder %s18, 1
      %p120 = scmp.ne.s32.totalorder %s115, %s117
      %p121 = scmp.eq.s32.totalorder %s18, 0
      %p122 = por %p120, %p121
      %p123 = scmp.ne.s32.totalorder %s115, %s117
      %p124 = scmp.eq.s32.totalorder %s23, 1
      %p125 = por %p123, %p124
      %p126 = scmp.ne.s32.totalorder %s117, %s118
      %p127 = scmp.eq.s32.totalorder %s23, 0
      %p128 = por %p126, %p127
      %p129 = scmp.ne.s32.totalorder %s117, %s118
      %p130 = scmp.eq.s32.totalorder %s24, 1
      %p131 = por %p129, %p130
      %p133 = scmp.ne.s32.totalorder %s118, %s132
      %p134 = scmp.eq.s32.totalorder %s24, 0
      %p135 = por %p133, %p134
      %s137 = sadd.s32 %s136, 1
      %p140 = scmp.eq.s32.totalorder %s18, 1
      %p141 = scmp.ne.s32.totalorder %s136, %s138
      %p142 = scmp.eq.s32.totalorder %s18, 0
      %p143 = por %p141, %p142
      %p144 = scmp.ne.s32.totalorder %s136, %s138
      %p145 = scmp.eq.s32.totalorder %s23, 1
      %p146 = por %p144, %p145
      %p147 = scmp.ne.s32.totalorder %s138, %s139
      %p148 = scmp.eq.s32.totalorder %s23, 0
      %p149 = por %p147, %p148
      %p150 = scmp.ne.s32.totalorder %s138, %s139
      %p151 = scmp.eq.s32.totalorder %s24, 1
      %p152 = por %p150, %p151
      %p154 = scmp.ne.s32.totalorder %s139, %s153
      %p155 = scmp.eq.s32.totalorder %s24, 0
      %p156 = por %p154, %p155
      %s158 = sadd.s32 %s157, 1
      %p161 = scmp.eq.s32.totalorder %s18, 1
      %p162 = scmp.ne.s32.totalorder %s157, %s159
      %p163 = scmp.eq.s32.totalorder %s18, 0
      %p164 = por %p162, %p163
      %p165 = scmp.ne.s32.totalorder %s157, %s159
      %p166 = scmp.eq.s32.totalorder %s23, 1
      %p167 = por %p165, %p166
      %p168 = scmp.ne.s32.totalorder %s159, %s160
      %p169 = scmp.eq.s32.totalorder %s23, 0
      %p170 = por %p168, %p169
      %p171 = scmp.ne.s32.totalorder %s159, %s160
      %p172 = scmp.eq.s32.totalorder %s24, 1
      %p173 = por %p171, %p172
      %p175 = scmp.ne.s32.totalorder %s160, %s174
      %p176 = scmp.eq.s32.totalorder %s24, 0
      %p177 = por %p175, %p176
      %s179 = sadd.s32 %s178, 1
      %p182 = scmp.eq.s32.totalorder %s18, 1
      %p183 = scmp.ne.s32.totalorder %s178, %s180
      %p184 = scmp.eq.s32.totalorder %s18, 0
      %p185 = por %p183, %p184
      %p186 = scmp.ne.s32.totalorder %s178, %s180
      %p187 = scmp.eq.s32.totalorder %s23, 1
      %p188 = por %p186, %p187
      %p189 = scmp.ne.s32.totalorder %s180, %s181
      %p190 = scmp.eq.s32.totalorder %s23, 0
      %p191 = por %p189, %p190
      %p192 = scmp.ne.s32.totalorder %s180, %s181
      %p193 = scmp.eq.s32.totalorder %s24, 1
      %p194 = por %p192, %p193
      %p196 = scmp.ne.s32.totalorder %s181, %s195
      %p197 = scmp.eq.s32.totalorder %s24, 0
      %p198 = por %p196, %p197
      %s200 = sadd.s32 %s199, 1
      %p203 = scmp.eq.s32.totalorder %s18, 1
      %p204 = scmp.ne.s32.totalorder %s199, %s201
      %p205 = scmp.eq.s32.totalorder %s18, 0
      %p206 = por %p204, %p205
      %p207 = scmp.ne.s32.totalorder %s199, %s201
      %p208 = scmp.eq.s32.totalorder %s23, 1
      %p209 = por %p207, %p208
      %p210 = scmp.ne.s32.totalorder %s201, %s202
      %p211 = scmp.eq.s32.totalorder %s23, 0
      %p212 = por %p210, %p211
      %p213 = scmp.ne.s32.totalorder %s201, %s202
      %p214 = scmp.eq.s32.totalorder %s24, 1
      %p215 = por %p213, %p214
      %p217 = scmp.ne.s32.totalorder %s202, %s216
      %p218 = scmp.eq.s32.totalorder %s24, 0
      %p219 = por %p217, %p218
      %s220 = ssub.s32 %s18, %s25
      %p221 = scmp.eq.s32.totalorder %s220, 0
      %s223 = sadd.s32 %s222, 1
      %s224 = scalar_select %p221, %s222, %s223
      %p227 = pneg %p221
      %p228 = scmp.eq.s32.totalorder %s18, 1
      %p229 = por %p227, %p228
      %p230 = scmp.ne.s32.totalorder %s222, %s225
      %p231 = scmp.eq.s32.totalorder %s18, 0
      %p232 = por %p230, %p231
      %p233 = scmp.ne.s32.totalorder %s222, %s225
      %p234 = scmp.eq.s32.totalorder %s23, 1
      %p235 = por %p233, %p234
      %p236 = scmp.ne.s32.totalorder %s225, %s226
      %p237 = scmp.eq.s32.totalorder %s23, 0
      %p238 = por %p236, %p237
      %p239 = scmp.ne.s32.totalorder %s225, %s226
      %p240 = scmp.eq.s32.totalorder %s24, 1
      %p241 = por %p239, %p240
      %p243 = scmp.ne.s32.totalorder %s226, %s242
      %p244 = scmp.eq.s32.totalorder %s24, 0
      %p245 = por %p243, %p244
      %p246 = scmp.le.s32.totalorder 1, %s18
      %p247 = scmp.lt.s32.totalorder %s18, 3
      %p248 = pnand %p246, %p247
      %p249 = pneg %p248
      // Predicated region
      $region9: #{tpu_custom_call.1} parent=5 // pred_check
        _
      $region10: #{tpu_custom_call.1} parent=5 // pred_check_branch
        %251 = sbr.rel (%p248) target = $region12
      $region11: #{tpu_custom_call.1} parent=5 // pred_region
        %s252 = ssub.s32 %s18, 1
        // Predicated region
        $region13: #{tpu_custom_call.1} parent=11 // pred_check
          %p253 = pneg %p65
        $region14: #{tpu_custom_call.1} parent=11 // pred_check_branch
          %255 = sbr.rel (%p253) target = $region16
        $region15: #{tpu_custom_call.1} parent=11 // pred_region
          _
        $region16: #{tpu_custom_call.1} parent=11 // pred_fallthru
          _
        // Predicated region
        $region17: #{tpu_custom_call.1} parent=11 // pred_check
          %p256 = pneg %p86
        $region18: #{tpu_custom_call.1} parent=11 // pred_check_branch
          %258 = sbr.rel (%p256) target = $region20
        $region19: #{tpu_custom_call.1} parent=11 // pred_region
          _
        $region20: #{tpu_custom_call.1} parent=11 // pred_fallthru
          _
        // Predicated region
        $region21: #{tpu_custom_call.1} parent=11 // pred_check
          %p259 = pneg %p107
        $region22: #{tpu_custom_call.1} parent=11 // pred_check_branch
          %261 = sbr.rel (%p259) target = $region24
        $region23: #{tpu_custom_call.1} parent=11 // pred_region
          _
        $region24: #{tpu_custom_call.1} parent=11 // pred_fallthru
          _
        // Predicated region
        $region25: #{tpu_custom_call.1} parent=11 // pred_check
          %p262 = pneg %p128
        $region26: #{tpu_custom_call.1} parent=11 // pred_check_branch
          %264 = sbr.rel (%p262) target = $region28
        $region27: #{tpu_custom_call.1} parent=11 // pred_region
          _
        $region28: #{tpu_custom_call.1} parent=11 // pred_fallthru
          _
        // Predicated region
        $region29: #{tpu_custom_call.1} parent=11 // pred_check
          %p265 = pneg %p149
        $region30: #{tpu_custom_call.1} parent=11 // pred_check_branch
          %267 = sbr.rel (%p265) target = $region32
        $region31: #{tpu_custom_call.1} parent=11 // pred_region
          _
        $region32: #{tpu_custom_call.1} parent=11 // pred_fallthru
          _
        // Predicated region
        $region33: #{tpu_custom_call.1} parent=11 // pred_check
          %p268 = pneg %p170
        $region34: #{tpu_custom_call.1} parent=11 // pred_check_branch
          %270 = sbr.rel (%p268) target = $region36
        $region35: #{tpu_custom_call.1} parent=11 // pred_region
          _
        $region36: #{tpu_custom_call.1} parent=11 // pred_fallthru
          _
        // Predicated region
        $region37: #{tpu_custom_call.1} parent=11 // pred_check
          %p271 = pneg %p191
        $region38: #{tpu_custom_call.1} parent=11 // pred_check_branch
          %273 = sbr.rel (%p271) target = $region40
        $region39: #{tpu_custom_call.1} parent=11 // pred_region
          _
        $region40: #{tpu_custom_call.1} parent=11 // pred_fallthru
          _
        // Predicated region
        $region41: #{tpu_custom_call.1} parent=11 // pred_check
          %p274 = pneg %p212
        $region42: #{tpu_custom_call.1} parent=11 // pred_check_branch
          %276 = sbr.rel (%p274) target = $region44
        $region43: #{tpu_custom_call.1} parent=11 // pred_region
          _
        $region44: #{tpu_custom_call.1} parent=11 // pred_fallthru
          _
      $region12: #{tpu_custom_call.1} parent=5 // pred_fallthru
        _
      %p277 = scmp.lt.s32.totalorder %s18, 2
      // Predicated region
      $region45: #{tpu_custom_call.1} parent=5 // pred_check
        %p278 = pneg %p277
      $region46: #{tpu_custom_call.1} parent=5 // pred_check_branch
        %280 = sbr.rel (%p278) target = $region48
      $region47: #{tpu_custom_call.1} parent=5 // pred_region
        // Predicated region
        $region49: #{tpu_custom_call.1} parent=47 // pred_check
          %p281 = pneg %p38
        $region50: #{tpu_custom_call.1} parent=47 // pred_check_branch
          %283 = sbr.rel (%p281) target = $region52
        $region51: #{tpu_custom_call.1} parent=47 // pred_region
          %p284 = scmp.lt.s32.totalorder %s18, 1
          %s285 = scalar_select %p284, %s18, 1
          %s286 = smul.addr %s285, 4
          %s287 = smul.addr %s286, 8
          %s288 = scalar_lea.vmem %s0, %s287
        $region52: #{tpu_custom_call.1} parent=47 // pred_fallthru
          _
      $region48: #{tpu_custom_call.1} parent=5 // pred_fallthru
        _
      %p289 = scmp.le.s32.totalorder 1, %s18
      %p290 = scmp.lt.s32.totalorder %s18, 3
      %p291 = pnand %p289, %p290
      %p292 = pneg %p291
      // Predicated region
      $region53: #{tpu_custom_call.1} parent=5 // pred_check
        _
      $region54: #{tpu_custom_call.1} parent=5 // pred_check_branch
        %294 = sbr.rel (%p291) target = $region56
      $region55: #{tpu_custom_call.1} parent=5 // pred_region
        %s295 = ssub.s32 %s18, 1
        %p296 = scmp.lt.s32.totalorder %s23, 1
        %s297 = scalar_select %p296, %s23, 1
        %s298 = smul.addr %s297, 4
        %s299 = smul.addr %s298, 8
        %s300 = scalar_lea.vmem %s0, %s299
        %p301 = pneg %p44
        %p302 = pneg %p41
        %p303 = pneg %p65
        %p304 = pneg %p62
        %p305 = pneg %p86
        %p306 = pneg %p83
        %p307 = pneg %p107
        %p308 = pneg %p104
        %p309 = pneg %p128
        %p310 = pneg %p125
        %p311 = pneg %p149
        %p312 = pneg %p146
        %p313 = pneg %p170
        %p314 = pneg %p167
        %p315 = pneg %p191
        %p316 = pneg %p188
        %p317 = pneg %p212
        %p318 = pneg %p209
        %p319 = pneg %p238
        %p320 = pneg %p235
        %s321 = sand.u32 %s225, 1
        %s322 = scalar_lea.sflag [#allocation4], %s321
        %s323 = sand.u32 %s225, 1
        %s324 = smul.addr %s323, 48
        %s325 = scalar_lea.vmem [#allocation3], %s324
        %p326 = scmp.lt.s32.totalorder %s23, 1
        %s327 = scalar_select %p326, %s23, 1
        %s328 = smul.addr %s327, 4
        %s329 = smul.addr %s328, 8
        %s330 = scalar_lea.vmem %s0, %s329
        %v331 = vld [vmem:[%s330] sm:$0xff]
        %v332 = vld [vmem:[%s330 + $0x8] sm:$0xff]
        %v333 = vld [vmem:[%s330 + $0x10] sm:$0xff]
        %v334 = vld [vmem:[%s330 + $0x18] sm:$0xff]
        %v335 = vld [vmem:[%s1] sm:$0xff]
        %v336 = vld [vmem:[%s1 + $0x8] sm:$0xff]
        %338 = vset.pattern.permute.xlu0 0
        %339 = vperm.xlu0 %338, %v335
        %v340 = vpop.permute.xlu0 %339
        %343 = vset.pattern.permute.xlu0 0
        %344 = vperm.xlu0 %343, %v336
        %v345 = vpop.permute.xlu0 %344
        %v347 = vmul.f32 %v331, %v340
        %v348 = vmul.f32 %v332, %v340
        %v349 = vmul.f32 %v333, %v345
        %v350 = vmul.f32 %v334, %v345
        %v351 = vld [vmem:[%s2] sm:$0xff]
        %v352 = vld [vmem:[%s2 + $0x8] sm:$0xff]
        %354 = vset.pattern.permute.xlu0 0
        %355 = vperm.xlu0 %354, %v351
        %v356 = vpop.permute.xlu0 %355
        %359 = vset.pattern.permute.xlu0 0
        %360 = vperm.xlu0 %359, %v352
        %v361 = vpop.permute.xlu0 %360
        %v363 = vadd.f32 %v347, %v356
        %v364 = vadd.f32 %v348, %v356
        %v365 = vadd.f32 %v349, %v361
        %v366 = vadd.f32 %v350, %v361
        %v367 = vmax.f32 %v363, 0.0
        %v368 = vmax.f32 %v364, 0.0
        %v369 = vmax.f32 %v365, 0.0
        %v370 = vmax.f32 %v366, 0.0
        %v371 = vld [vmem:[%s3] sm:$0xff]
        %v372 = vld [vmem:[%s3 + $0x8] sm:$0xff]
        %v373 = vld [vmem:[%s3 + $0x10] sm:$0xff]
        %v374 = vld [vmem:[%s3 + $0x18] sm:$0xff]
        %v375 = vld [vmem:[%s4] sm:$0xff]
        %v376 = vld [vmem:[%s4 + $0x8] sm:$0xff]
        %v377 = vld [vmem:[%s4 + $0x10] sm:$0xff]
        %v378 = vld [vmem:[%s4 + $0x18] sm:$0xff]
        %380 = vset.pattern.permute.xlu0 0
        %381 = vperm.xlu0 %380, %v375
        %v382 = vpop.permute.xlu0 %381
        %385 = vset.pattern.permute.xlu0 0
        %386 = vperm.xlu0 %385, %v376
        %v387 = vpop.permute.xlu0 %386
        %390 = vset.pattern.permute.xlu0 0
        %391 = vperm.xlu0 %390, %v377
        %v392 = vpop.permute.xlu0 %391
        %395 = vset.pattern.permute.xlu0 0
        %396 = vperm.xlu0 %395, %v378
        %v397 = vpop.permute.xlu0 %396
        %vm399 = vcmask 130048
        %v401 = vsel %vm399, %v371, 0
        %v404 = vsel %vm399, %v372, 0
        %v407 = vsel %vm399, %v373, 0
        %v410 = vsel %vm399, %v374, 0
        %412 = vmatprep.subr.mxu0 0.0
        %413 = vmatpush1.msra.mxu0 0.0
        %414 = vmatprep.subr.mxu0 0.0
        %415 = vmatpush1.msra.mxu0 0.0
        %416 = vmatprep.subr.mxu0 0.0
        %417 = vmatpush1.msra.mxu0 0.0
        %418 = vmatprep.subr.mxu0 0.0
        %419 = vmatpush1.msra.mxu0 0.0
        %420 = vmatprep.subr.mxu0 0.0
        %421 = vmatpush1.msra.mxu0 0.0
        %422 = vmatprep.subr.mxu0 0.0
        %423 = vmatpush1.msra.mxu0 0.0
        %424 = vmatprep.subr.mxu0 0.0
        %425 = vmatpush1.msra.mxu0 0.0
        %426 = vmatprep.subr.mxu0 0.0
        %427 = vmatpush1.msra.mxu0 0.0
        %428 = vmatprep.subr.mxu0 0.0
        %429 = vmatpush1.msra.mxu0 0.0
        %430 = vmatprep.subr.mxu0 0.0
        %431 = vmatpush1.msra.mxu0 0.0
        %432 = vmatprep.subr.mxu0 0.0
        %433 = vmatpush1.msra.mxu0 0.0
        %434 = vmatprep.subr.mxu0 0.0
        %435 = vmatpush1.msra.mxu0 0.0
        %436 = vmatprep.subr.mxu0 0.0
        %437 = vmatpush1.msra.mxu0 0.0
        %438 = vmatprep.subr.mxu0 0.0
        %439 = vmatpush1.msra.mxu0 0.0
        %440 = vmatprep.subr.mxu0 %v370
        %441 = vmatpush1.msra.mxu0 %v369
        %442 = vmatprep.subr.mxu0 %v368
        %443 = vmatpush1.msra.mxu0 %v367
        %444 = vmatprep.subr.mxu0 0.0
        %445 = vmatpush2.msra.mxu0 0.0
        %446 = vmatprep.subr.mxu0 0.0
        %447 = vmatpush2.msra.mxu0 0.0
        %448 = vmatprep.subr.mxu0 0.0
        %449 = vmatpush2.msra.mxu0 0.0
        %450 = vmatprep.subr.mxu0 0.0
        %451 = vmatpush2.msra.mxu0 0.0
        %452 = vmatprep.subr.mxu0 0.0
        %453 = vmatpush2.msra.mxu0 0.0
        %454 = vmatprep.subr.mxu0 0.0
        %455 = vmatpush2.msra.mxu0 0.0
        %456 = vmatprep.subr.mxu0 0.0
        %457 = vmatpush2.msra.mxu0 0.0
        %458 = vmatprep.subr.mxu0 0.0
        %459 = vmatpush2.msra.mxu0 0.0
        %460 = vmatprep.subr.mxu0 0.0
        %461 = vmatpush2.msra.mxu0 0.0
        %462 = vmatprep.subr.mxu0 0.0
        %463 = vmatpush2.msra.mxu0 0.0
        %464 = vmatprep.subr.mxu0 0.0
        %465 = vmatpush2.msra.mxu0 0.0
        %466 = vmatprep.subr.mxu0 0.0
        %467 = vmatpush2.msra.mxu0 0.0
        %468 = vmatprep.subr.mxu0 0.0
        %469 = vmatpush2.msra.mxu0 0.0
        %470 = vmatprep.subr.mxu0 0.0
        %471 = vmatpush2.msra.mxu0 0.0
        %472 = vmatprep.subr.mxu0 0.0
        %473 = vmatpush2.msra.mxu0 0.0
        %474 = vmatprep.subr.mxu0 0.0
        %475 = vmatpush2.msra.mxu0 0.0
        %476 = vmatprep.mubr.f32.mxu0 0.0
        %477 = vmatmul.mubr.f32.gmra.mxu0 %v401
        %v478 = vpop.f32.mrf.mxu0
        %v479 = vadd.f32 %v382, %v478
        %v480 = vpop.f32.mrf.mxu0
        %v481 = vadd.f32 %v382, %v480
        %482 = vmatprep.mubr.f32.mxu0 0.0
        %483 = vmatmul.mubr.f32.gmra.mxu0 %v404
        %v484 = vpop.f32.mrf.mxu0
        %v485 = vadd.f32 %v387, %v484
        %v486 = vpop.f32.mrf.mxu0
        %v487 = vadd.f32 %v387, %v486
        %488 = vmatprep.mubr.f32.mxu0 0.0
        %489 = vmatmul.mubr.f32.gmra.mxu0 %v407
        %v490 = vpop.f32.mrf.mxu0
        %v491 = vadd.f32 %v392, %v490
        %v492 = vpop.f32.mrf.mxu0
        %v493 = vadd.f32 %v392, %v492
        %494 = vmatprep.mubr.f32.mxu0 0.0
        %495 = vmatmul.mubr.f32.gmra.mxu0 %v410
        %v496 = vpop.f32.mrf.mxu0
        %v497 = vadd.f32 %v397, %v496
        %v498 = vpop.f32.mrf.mxu0
        %v499 = vadd.f32 %v397, %v498
        %500 = vdwg.mxu0
        %v501 = vld [vmem:[%s5] sm:$0xff]
        %v502 = vld [vmem:[%s5 + $0x8] sm:$0xff]
        %v503 = vld [vmem:[%s5 + $0x10] sm:$0xff]
        %v504 = vld [vmem:[%s5 + $0x18] sm:$0xff]
        %506 = vset.pattern.permute.xlu0 0
        %507 = vperm.xlu0 %506, %v501
        %v508 = vpop.permute.xlu0 %507
        %511 = vset.pattern.permute.xlu0 0
        %512 = vperm.xlu0 %511, %v502
        %v513 = vpop.permute.xlu0 %512
        %516 = vset.pattern.permute.xlu0 0
        %517 = vperm.xlu0 %516, %v503
        %v518 = vpop.permute.xlu0 %517
        %521 = vset.pattern.permute.xlu0 0
        %522 = vperm.xlu0 %521, %v504
        %v523 = vpop.permute.xlu0 %522
        %v525 = vmul.f32 %v479, %v508
        %v526 = vmul.f32 %v481, %v508
        %v527 = vmul.f32 %v485, %v513
        %v528 = vmul.f32 %v487, %v513
        %v529 = vmul.f32 %v491, %v518
        %v530 = vmul.f32 %v493, %v518
        %v531 = vmul.f32 %v497, %v523
        %v532 = vmul.f32 %v499, %v523
        %v533 = vld [vmem:[%s6] sm:$0xff]
        %v534 = vld [vmem:[%s6 + $0x8] sm:$0xff]
        %v535 = vld [vmem:[%s6 + $0x10] sm:$0xff]
        %v536 = vld [vmem:[%s6 + $0x18] sm:$0xff]
        %538 = vset.pattern.permute.xlu0 0
        %539 = vperm.xlu0 %538, %v533
        %v540 = vpop.permute.xlu0 %539
        %543 = vset.pattern.permute.xlu0 0
        %544 = vperm.xlu0 %543, %v534
        %v545 = vpop.permute.xlu0 %544
        %548 = vset.pattern.permute.xlu0 0
        %549 = vperm.xlu0 %548, %v535
        %v550 = vpop.permute.xlu0 %549
        %553 = vset.pattern.permute.xlu0 0
        %554 = vperm.xlu0 %553, %v536
        %v555 = vpop.permute.xlu0 %554
        %v557 = vadd.f32 %v525, %v540
        %v558 = vadd.f32 %v526, %v540
        %v559 = vadd.f32 %v527, %v545
        %v560 = vadd.f32 %v528, %v545
        %v561 = vadd.f32 %v529, %v550
        %v562 = vadd.f32 %v530, %v550
        %v563 = vadd.f32 %v531, %v555
        %v564 = vadd.f32 %v532, %v555
        %v565 = vmax.f32 %v557, 0.0
        %v566 = vmax.f32 %v558, 0.0
        %v567 = vmax.f32 %v559, 0.0
        %v568 = vmax.f32 %v560, 0.0
        %v569 = vmax.f32 %v561, 0.0
        %v570 = vmax.f32 %v562, 0.0
        %v571 = vmax.f32 %v563, 0.0
        %v572 = vmax.f32 %v564, 0.0
        %573 = vst [vmem:[#allocation2] sm:$0xff] 0.0
        %574 = vst [vmem:[#allocation2 + $0x20] sm:$0xff] 0.0
        %575 = vst [vmem:[#allocation2 + $0x40] sm:$0xff] 0.0
        %576 = vst [vmem:[#allocation2 + $0x60] sm:$0xff] 0.0
        %577 = vst [vmem:[#allocation2 + $0x18] sm:$0xff] 0.0
        %578 = vst [vmem:[#allocation2 + $0x38] sm:$0xff] 0.0
        %579 = vst [vmem:[#allocation2 + $0x58] sm:$0xff] 0.0
        %580 = vst [vmem:[#allocation2 + $0x78] sm:$0xff] 0.0
        %581 = vst [vmem:[#allocation2 + $0x8] sm:$0xff] %v565
        %582 = vst [vmem:[#allocation2 + $0x10] sm:$0xff] %v566
        %583 = vst [vmem:[#allocation2 + $0x28] sm:$0xff] %v567
        %584 = vst [vmem:[#allocation2 + $0x30] sm:$0xff] %v568
        %585 = vst [vmem:[#allocation2 + $0x48] sm:$0xff] %v569
        %586 = vst [vmem:[#allocation2 + $0x50] sm:$0xff] %v570
        %587 = vst [vmem:[#allocation2 + $0x68] sm:$0xff] %v571
        %588 = vst [vmem:[#allocation2 + $0x70] sm:$0xff] %v572
        %v589 = vlaneseq
        %v590 = vand.u32 %v589, 127
        %v591 = vadd.s32 %v590, 128
        %vm592 = vcmp.lt.s32.totalorder %v590, 0
        %v593 = vsub.s32 0, %v590
        %v594 = vsel %vm592, %v593, %v590
        %v595 = vshrl.u32 %v594, 4
        %v596 = vand.u32 %v594, 15
        %v597 = vsub.s32 0, %v596
        %v598 = vsel %vm592, %v597, %v596
        %vm599 = vcmp.lt.s32.totalorder %v591, 0
        %v600 = vsub.s32 0, %v591
        %v601 = vsel %vm599, %v600, %v591
        %v602 = vshrl.u32 %v601, 4
        %v603 = vand.u32 %v601, 15
        %v604 = vsub.s32 0, %v603
        %v605 = vsel %vm599, %v604, %v603
        %vm606 = vcmp.ne.s32.totalorder %v598, 0
        %vm607 = vcmp.ne.s32.totalorder %v605, 0
        %vm608 = vcmp.lt.s32.totalorder %v598, 0
        %vm609 = vcmp.lt.s32.totalorder %v605, 0
        %vm610 = vmand %vm608, %vm606
        %vm611 = vmand %vm609, %vm607
        %v612 = vadd.s32 %v598, 16
        %v613 = vadd.s32 %v605, 16
        %v614 = vsel %vm610, %v612, %v598
        %v615 = vsel %vm611, %v613, %v605
        %vm616 = vcmp.ne.s32.totalorder %v614, 0
        %vm617 = vcmp.ne.s32.totalorder %v615, 0
        %vm618 = vcmp.ne.s32.totalorder %v614, 15
        %vm619 = vcmp.ne.s32.totalorder %v615, 15
        %v620 = vld [vmem:[#allocation2] sm:$0xff]
        %v621 = vld [vmem:[#allocation2 + $0x8] sm:$0xff]
        %v622 = vld [vmem:[#allocation2 + $0x10] sm:$0xff]
        %v623 = vld [vmem:[#allocation2 + $0x20] sm:$0xff]
        %v624 = vld [vmem:[#allocation2 + $0x28] sm:$0xff]
        %v625 = vld [vmem:[#allocation2 + $0x30] sm:$0xff]
        %v626 = vld [vmem:[#allocation2 + $0x40] sm:$0xff]
        %v627 = vld [vmem:[#allocation2 + $0x48] sm:$0xff]
        %v628 = vld [vmem:[#allocation2 + $0x50] sm:$0xff]
        %v629 = vld [vmem:[#allocation2 + $0x60] sm:$0xff]
        %v630 = vld [vmem:[#allocation2 + $0x68] sm:$0xff]
        %v631 = vld [vmem:[#allocation2 + $0x70] sm:$0xff]
        %644 = vrot.lane.b32.xlu0 %v620, 17
        %v645 = vpop.permute.xlu0 %644
        %646 = vrot.lane.b32.xlu0 %v621, 17
        %v647 = vpop.permute.xlu0 %646
        %648 = vrot.lane.b32.xlu0 %v622, 17
        %v649 = vpop.permute.xlu0 %648
        %650 = vrot.lane.b32.xlu0 %v623, 17
        %v651 = vpop.permute.xlu0 %650
        %652 = vrot.lane.b32.xlu0 %v624, 17
        %v653 = vpop.permute.xlu0 %652
        %654 = vrot.lane.b32.xlu0 %v625, 17
        %v655 = vpop.permute.xlu0 %654
        %656 = vrot.lane.b32.xlu0 %v626, 17
        %v657 = vpop.permute.xlu0 %656
        %658 = vrot.lane.b32.xlu0 %v627, 17
        %v659 = vpop.permute.xlu0 %658
        %660 = vrot.lane.b32.xlu0 %v628, 17
        %v661 = vpop.permute.xlu0 %660
        %662 = vrot.lane.b32.xlu0 %v629, 17
        %v663 = vpop.permute.xlu0 %662
        %664 = vrot.lane.b32.xlu0 %v630, 17
        %v665 = vpop.permute.xlu0 %664
        %666 = vrot.lane.b32.xlu0 %v631, 17
        %v667 = vpop.permute.xlu0 %666
        %vm668 = vcmask 138240
        %v669 = vsel %vm668, %v645, %v647
        %v670 = vsel %vm668, %v647, %v649
        %v671 = vsel %vm668, %v651, %v653
        %v672 = vsel %vm668, %v653, %v655
        %v673 = vsel %vm668, %v657, %v659
        %v674 = vsel %vm668, %v659, %v661
        %v675 = vsel %vm668, %v663, %v665
        %v676 = vsel %vm668, %v665, %v667
        %v685 = vsel %vm616, %v669, 0.0
        %v686 = vsel %vm617, %v670, 0.0
        %v687 = vsel %vm616, %v671, 0.0
        %v688 = vsel %vm617, %v672, 0.0
        %v689 = vsel %vm616, %v673, 0.0
        %v690 = vsel %vm617, %v674, 0.0
        %v691 = vsel %vm616, %v675, 0.0
        %v692 = vsel %vm617, %v676, 0.0
        %693 = vrot.lane.b32.xlu0 %v620, 15
        %v694 = vpop.permute.xlu0 %693
        %695 = vrot.lane.b32.xlu0 %v621, 15
        %v696 = vpop.permute.xlu0 %695
        %697 = vrot.lane.b32.xlu0 %v622, 15
        %v698 = vpop.permute.xlu0 %697
        %699 = vrot.lane.b32.xlu0 %v623, 15
        %v700 = vpop.permute.xlu0 %699
        %701 = vrot.lane.b32.xlu0 %v624, 15
        %v702 = vpop.permute.xlu0 %701
        %703 = vrot.lane.b32.xlu0 %v625, 15
        %v704 = vpop.permute.xlu0 %703
        %705 = vrot.lane.b32.xlu0 %v626, 15
        %v706 = vpop.permute.xlu0 %705
        %707 = vrot.lane.b32.xlu0 %v627, 15
        %v708 = vpop.permute.xlu0 %707
        %709 = vrot.lane.b32.xlu0 %v628, 15
        %v710 = vpop.permute.xlu0 %709
        %711 = vrot.lane.b32.xlu0 %v629, 15
        %v712 = vpop.permute.xlu0 %711
        %713 = vrot.lane.b32.xlu0 %v630, 15
        %v714 = vpop.permute.xlu0 %713
        %715 = vrot.lane.b32.xlu0 %v631, 15
        %v716 = vpop.permute.xlu0 %715
        %vm717 = vcmask 121856
        %v718 = vsel %vm717, %v694, %v696
        %v719 = vsel %vm717, %v696, %v698
        %v720 = vsel %vm717, %v700, %v702
        %v721 = vsel %vm717, %v702, %v704
        %v722 = vsel %vm717, %v706, %v708
        %v723 = vsel %vm717, %v708, %v710
        %v724 = vsel %vm717, %v712, %v714
        %v725 = vsel %vm717, %v714, %v716
        %v734 = vsel %vm618, %v718, 0.0
        %v735 = vsel %vm619, %v719, 0.0
        %v736 = vsel %vm618, %v720, 0.0
        %v737 = vsel %vm619, %v721, 0.0
        %v738 = vsel %vm618, %v722, 0.0
        %v739 = vsel %vm619, %v723, 0.0
        %v740 = vsel %vm618, %v724, 0.0
        %v741 = vsel %vm619, %v725, 0.0
        %742 = vrot.lane.b32.xlu0 %v620, 16
        %v743 = vpop.permute.xlu0 %742
        %744 = vrot.lane.b32.xlu0 %v621, 16
        %v745 = vpop.permute.xlu0 %744
        %746 = vrot.lane.b32.xlu0 %v622, 16
        %v747 = vpop.permute.xlu0 %746
        %748 = vrot.lane.b32.xlu0 %v623, 16
        %v749 = vpop.permute.xlu0 %748
        %750 = vrot.lane.b32.xlu0 %v624, 16
        %v751 = vpop.permute.xlu0 %750
        %752 = vrot.lane.b32.xlu0 %v625, 16
        %v753 = vpop.permute.xlu0 %752
        %754 = vrot.lane.b32.xlu0 %v626, 16
        %v755 = vpop.permute.xlu0 %754
        %756 = vrot.lane.b32.xlu0 %v627, 16
        %v757 = vpop.permute.xlu0 %756
        %758 = vrot.lane.b32.xlu0 %v628, 16
        %v759 = vpop.permute.xlu0 %758
        %760 = vrot.lane.b32.xlu0 %v629, 16
        %v761 = vpop.permute.xlu0 %760
        %762 = vrot.lane.b32.xlu0 %v630, 16
        %v763 = vpop.permute.xlu0 %762
        %764 = vrot.lane.b32.xlu0 %v631, 16
        %v765 = vpop.permute.xlu0 %764
        %v766 = vsel %vm399, %v743, %v745
        %v767 = vsel %vm399, %v745, %v747
        %v768 = vsel %vm399, %v749, %v751
        %v769 = vsel %vm399, %v751, %v753
        %v770 = vsel %vm399, %v755, %v757
        %v771 = vsel %vm399, %v757, %v759
        %v772 = vsel %vm399, %v761, %v763
        %v773 = vsel %vm399, %v763, %v765
        %v782 = vld [vmem:[%s7] sm:$0xff]
        %783 = vrot.lane.b32.xlu0 %v620, 1
        %v784 = vpop.permute.xlu0 %783
        %785 = vrot.lane.b32.xlu0 %v621, 1
        %v786 = vpop.permute.xlu0 %785
        %787 = vrot.lane.b32.xlu0 %v622, 1
        %v788 = vpop.permute.xlu0 %787
        %789 = vrot.lane.b32.xlu0 %v623, 1
        %v790 = vpop.permute.xlu0 %789
        %791 = vrot.lane.b32.xlu0 %v624, 1
        %v792 = vpop.permute.xlu0 %791
        %793 = vrot.lane.b32.xlu0 %v625, 1
        %v794 = vpop.permute.xlu0 %793
        %795 = vrot.lane.b32.xlu0 %v626, 1
        %v796 = vpop.permute.xlu0 %795
        %797 = vrot.lane.b32.xlu0 %v627, 1
        %v798 = vpop.permute.xlu0 %797
        %799 = vrot.lane.b32.xlu0 %v628, 1
        %v800 = vpop.permute.xlu0 %799
        %801 = vrot.lane.b32.xlu0 %v629, 1
        %v802 = vpop.permute.xlu0 %801
        %803 = vrot.lane.b32.xlu0 %v630, 1
        %v804 = vpop.permute.xlu0 %803
        %805 = vrot.lane.b32.xlu0 %v631, 1
        %v806 = vpop.permute.xlu0 %805
        %vm807 = vcmask 7168
        %v808 = vsel %vm807, %v784, %v786
        %v809 = vsel %vm807, %v786, %v788
        %v810 = vsel %vm807, %v790, %v792
        %v811 = vsel %vm807, %v792, %v794
        %v812 = vsel %vm807, %v796, %v798
        %v813 = vsel %vm807, %v798, %v800
        %v814 = vsel %vm807, %v802, %v804
        %v815 = vsel %vm807, %v804, %v806
        %v824 = vsel %vm616, %v808, 0.0
        %v825 = vsel %vm617, %v809, 0.0
        %v826 = vsel %vm616, %v810, 0.0
        %v827 = vsel %vm617, %v811, 0.0
        %v828 = vsel %vm616, %v812, 0.0
        %v829 = vsel %vm617, %v813, 0.0
        %v830 = vsel %vm616, %v814, 0.0
        %v831 = vsel %vm617, %v815, 0.0
        %v832 = vld [vmem:[#allocation2 + $0x8] sm:$0xff]
        %v833 = vld [vmem:[#allocation2 + $0x10] sm:$0xff]
        %v834 = vld [vmem:[#allocation2 + $0x18] sm:$0xff]
        %v835 = vld [vmem:[#allocation2 + $0x28] sm:$0xff]
        %v836 = vld [vmem:[#allocation2 + $0x30] sm:$0xff]
        %v837 = vld [vmem:[#allocation2 + $0x38] sm:$0xff]
        %v838 = vld [vmem:[#allocation2 + $0x48] sm:$0xff]
        %v839 = vld [vmem:[#allocation2 + $0x50] sm:$0xff]
        %v840 = vld [vmem:[#allocation2 + $0x58] sm:$0xff]
        %v841 = vld [vmem:[#allocation2 + $0x68] sm:$0xff]
        %v842 = vld [vmem:[#allocation2 + $0x70] sm:$0xff]
        %v843 = vld [vmem:[#allocation2 + $0x78] sm:$0xff]
        %856 = vrot.lane.b32.xlu0 %v832, 127
        %v857 = vpop.permute.xlu0 %856
        %858 = vrot.lane.b32.xlu0 %v833, 127
        %v859 = vpop.permute.xlu0 %858
        %860 = vrot.lane.b32.xlu0 %v834, 127
        %v861 = vpop.permute.xlu0 %860
        %862 = vrot.lane.b32.xlu0 %v835, 127
        %v863 = vpop.permute.xlu0 %862
        %864 = vrot.lane.b32.xlu0 %v836, 127
        %v865 = vpop.permute.xlu0 %864
        %866 = vrot.lane.b32.xlu0 %v837, 127
        %v867 = vpop.permute.xlu0 %866
        %868 = vrot.lane.b32.xlu0 %v838, 127
        %v869 = vpop.permute.xlu0 %868
        %870 = vrot.lane.b32.xlu0 %v839, 127
        %v871 = vpop.permute.xlu0 %870
        %872 = vrot.lane.b32.xlu0 %v840, 127
        %v873 = vpop.permute.xlu0 %872
        %874 = vrot.lane.b32.xlu0 %v841, 127
        %v875 = vpop.permute.xlu0 %874
        %876 = vrot.lane.b32.xlu0 %v842, 127
        %v877 = vpop.permute.xlu0 %876
        %878 = vrot.lane.b32.xlu0 %v843, 127
        %v879 = vpop.permute.xlu0 %878
        %vm880 = vcmask 1039360
        %v881 = vsel %vm880, %v857, %v859
        %v882 = vsel %vm880, %v859, %v861
        %v883 = vsel %vm880, %v863, %v865
        %v884 = vsel %vm880, %v865, %v867
        %v885 = vsel %vm880, %v869, %v871
        %v886 = vsel %vm880, %v871, %v873
        %v887 = vsel %vm880, %v875, %v877
        %v888 = vsel %vm880, %v877, %v879
        %v897 = vsel %vm618, %v881, 0.0
        %v898 = vsel %vm619, %v882, 0.0
        %v899 = vsel %vm618, %v883, 0.0
        %v900 = vsel %vm619, %v884, 0.0
        %v901 = vsel %vm618, %v885, 0.0
        %v902 = vsel %vm619, %v886, 0.0
        %v903 = vsel %vm618, %v887, 0.0
        %v904 = vsel %vm619, %v888, 0.0
        %s905 = scalar_lea.vmem %s7, 8
        %v906 = vld [vmem:[%s905] sm:$0xff]
        %vm907 = vcmask 785408
        %v909 = vsel %vm907, %v906, 0
        %911 = vmatprep.subr.mxu0 0.0
        %912 = vmatpush1.msra.mxu0 0.0
        %913 = vmatprep.subr.mxu0 0.0
        %914 = vmatpush1.msra.mxu0 0.0
        %915 = vmatprep.subr.mxu0 0.0
        %916 = vmatpush1.msra.mxu0 0.0
        %917 = vmatprep.subr.mxu0 0.0
        %918 = vmatpush1.msra.mxu0 0.0
        %919 = vmatprep.subr.mxu0 %v904
        %920 = vmatpush1.msra.mxu0 %v903
        %921 = vmatprep.subr.mxu0 %v902
        %922 = vmatpush1.msra.mxu0 %v901
        %923 = vmatprep.subr.mxu0 %v900
        %924 = vmatpush1.msra.mxu0 %v899
        %925 = vmatprep.subr.mxu0 %v898
        %926 = vmatpush1.msra.mxu0 %v897
        %927 = vmatprep.subr.mxu0 %v631
        %928 = vmatpush1.msra.mxu0 %v630
        %929 = vmatprep.subr.mxu0 %v628
        %930 = vmatpush1.msra.mxu0 %v627
        %931 = vmatprep.subr.mxu0 %v625
        %932 = vmatpush1.msra.mxu0 %v624
        %933 = vmatprep.subr.mxu0 %v622
        %934 = vmatpush1.msra.mxu0 %v621
        %935 = vmatprep.subr.mxu0 %v831
        %936 = vmatpush1.msra.mxu0 %v830
        %937 = vmatprep.subr.mxu0 %v829
        %938 = vmatpush1.msra.mxu0 %v828
        %939 = vmatprep.subr.mxu0 %v827
        %940 = vmatpush1.msra.mxu0 %v826
        %941 = vmatprep.subr.mxu0 %v825
        %942 = vmatpush1.msra.mxu0 %v824
        %943 = vmatprep.subr.mxu0 0.0
        %944 = vmatpush2.msra.mxu0 0.0
        %945 = vmatprep.subr.mxu0 0.0
        %946 = vmatpush2.msra.mxu0 0.0
        %947 = vmatprep.subr.mxu0 0.0
        %948 = vmatpush2.msra.mxu0 0.0
        %949 = vmatprep.subr.mxu0 0.0
        %950 = vmatpush2.msra.mxu0 0.0
        %951 = vmatprep.subr.mxu0 0.0
        %952 = vmatpush2.msra.mxu0 0.0
        %953 = vmatprep.subr.mxu0 0.0
        %954 = vmatpush2.msra.mxu0 0.0
        %955 = vmatprep.subr.mxu0 0.0
        %956 = vmatpush2.msra.mxu0 0.0
        %957 = vmatprep.subr.mxu0 0.0
        %958 = vmatpush2.msra.mxu0 0.0
        %959 = vmatprep.subr.mxu0 0.0
        %960 = vmatpush2.msra.mxu0 0.0
        %961 = vmatprep.subr.mxu0 0.0
        %962 = vmatpush2.msra.mxu0 0.0
        %963 = vmatprep.subr.mxu0 0.0
        %964 = vmatpush2.msra.mxu0 0.0
        %965 = vmatprep.subr.mxu0 0.0
        %966 = vmatpush2.msra.mxu0 0.0
        %967 = vmatprep.subr.mxu0 0.0
        %968 = vmatpush2.msra.mxu0 0.0
        %969 = vmatprep.subr.mxu0 0.0
        %970 = vmatpush2.msra.mxu0 0.0
        %971 = vmatprep.subr.mxu0 0.0
        %972 = vmatpush2.msra.mxu0 0.0
        %973 = vmatprep.subr.mxu0 0.0
        %974 = vmatpush2.msra.mxu0 0.0
        %975 = vmatprep.mubr.f32.mxu0 0.0
        %976 = vmatmul.mubr.f32.gmra.mxu0 %v909
        %v977 = vpop.f32.mrf.mxu0
        %v978 = vadd.f32 0.0, %v977
        %v979 = vpop.f32.mrf.mxu0
        %v980 = vadd.f32 0.0, %v979
        %981 = vdwg.mxu0
        %v983 = vsel %vm907, %v782, 0
        %985 = vmatprep.subr.mxu0 0.0
        %986 = vmatpush1.msra.mxu0 0.0
        %987 = vmatprep.subr.mxu0 0.0
        %988 = vmatpush1.msra.mxu0 0.0
        %989 = vmatprep.subr.mxu0 0.0
        %990 = vmatpush1.msra.mxu0 0.0
        %991 = vmatprep.subr.mxu0 0.0
        %992 = vmatpush1.msra.mxu0 0.0
        %993 = vmatprep.subr.mxu0 %v741
        %994 = vmatpush1.msra.mxu0 %v740
        %995 = vmatprep.subr.mxu0 %v739
        %996 = vmatpush1.msra.mxu0 %v738
        %997 = vmatprep.subr.mxu0 %v737
        %998 = vmatpush1.msra.mxu0 %v736
        %999 = vmatprep.subr.mxu0 %v735
        %1000 = vmatpush1.msra.mxu0 %v734
        %1001 = vmatprep.subr.mxu0 %v773
        %1002 = vmatpush1.msra.mxu0 %v772
        %1003 = vmatprep.subr.mxu0 %v771
        %1004 = vmatpush1.msra.mxu0 %v770
        %1005 = vmatprep.subr.mxu0 %v769
        %1006 = vmatpush1.msra.mxu0 %v768
        %1007 = vmatprep.subr.mxu0 %v767
        %1008 = vmatpush1.msra.mxu0 %v766
        %1009 = vmatprep.subr.mxu0 %v692
        %1010 = vmatpush1.msra.mxu0 %v691
        %1011 = vmatprep.subr.mxu0 %v690
        %1012 = vmatpush1.msra.mxu0 %v689
        %1013 = vmatprep.subr.mxu0 %v688
        %1014 = vmatpush1.msra.mxu0 %v687
        %1015 = vmatprep.subr.mxu0 %v686
        %1016 = vmatpush1.msra.mxu0 %v685
        %1017 = vmatprep.subr.mxu0 0.0
        %1018 = vmatpush2.msra.mxu0 0.0
        %1019 = vmatprep.subr.mxu0 0.0
        %1020 = vmatpush2.msra.mxu0 0.0
        %1021 = vmatprep.subr.mxu0 0.0
        %1022 = vmatpush2.msra.mxu0 0.0
        %1023 = vmatprep.subr.mxu0 0.0
        %1024 = vmatpush2.msra.mxu0 0.0
        %1025 = vmatprep.subr.mxu0 0.0
        %1026 = vmatpush2.msra.mxu0 0.0
        %1027 = vmatprep.subr.mxu0 0.0
        %1028 = vmatpush2.msra.mxu0 0.0
        %1029 = vmatprep.subr.mxu0 0.0
        %1030 = vmatpush2.msra.mxu0 0.0
        %1031 = vmatprep.subr.mxu0 0.0
        %1032 = vmatpush2.msra.mxu0 0.0
        %1033 = vmatprep.subr.mxu0 0.0
        %1034 = vmatpush2.msra.mxu0 0.0
        %1035 = vmatprep.subr.mxu0 0.0
        %1036 = vmatpush2.msra.mxu0 0.0
        %1037 = vmatprep.subr.mxu0 0.0
        %1038 = vmatpush2.msra.mxu0 0.0
        %1039 = vmatprep.subr.mxu0 0.0
        %1040 = vmatpush2.msra.mxu0 0.0
        %1041 = vmatprep.subr.mxu0 0.0
        %1042 = vmatpush2.msra.mxu0 0.0
        %1043 = vmatprep.subr.mxu0 0.0
        %1044 = vmatpush2.msra.mxu0 0.0
        %1045 = vmatprep.subr.mxu0 0.0
        %1046 = vmatpush2.msra.mxu0 0.0
        %1047 = vmatprep.subr.mxu0 0.0
        %1048 = vmatpush2.msra.mxu0 0.0
        %1049 = vmatprep.mubr.f32.mxu0 0.0
        %1050 = vmatmul.mubr.f32.gmra.mxu0 %v983
        %v1051 = vpop.f32.mrf.mxu0
        %v1052 = vadd.f32 %v978, %v1051
        %v1053 = vpop.f32.mrf.mxu0
        %v1054 = vadd.f32 %v980, %v1053
        %1055 = vdwg.mxu0
        %1056 = vrot.lane.b32.xlu0 %v832, 113
        %v1057 = vpop.permute.xlu0 %1056
        %1058 = vrot.lane.b32.xlu0 %v833, 113
        %v1059 = vpop.permute.xlu0 %1058
        %1060 = vrot.lane.b32.xlu0 %v834, 113
        %v1061 = vpop.permute.xlu0 %1060
        %1062 = vrot.lane.b32.xlu0 %v835, 113
        %v1063 = vpop.permute.xlu0 %1062
        %1064 = vrot.lane.b32.xlu0 %v836, 113
        %v1065 = vpop.permute.xlu0 %1064
        %1066 = vrot.lane.b32.xlu0 %v837, 113
        %v1067 = vpop.permute.xlu0 %1066
        %1068 = vrot.lane.b32.xlu0 %v838, 113
        %v1069 = vpop.permute.xlu0 %1068
        %1070 = vrot.lane.b32.xlu0 %v839, 113
        %v1071 = vpop.permute.xlu0 %1070
        %1072 = vrot.lane.b32.xlu0 %v840, 113
        %v1073 = vpop.permute.xlu0 %1072
        %1074 = vrot.lane.b32.xlu0 %v841, 113
        %v1075 = vpop.permute.xlu0 %1074
        %1076 = vrot.lane.b32.xlu0 %v842, 113
        %v1077 = vpop.permute.xlu0 %1076
        %1078 = vrot.lane.b32.xlu0 %v843, 113
        %v1079 = vpop.permute.xlu0 %1078
        %vm1080 = vcmask 924672
        %v1081 = vsel %vm1080, %v1057, %v1059
        %v1082 = vsel %vm1080, %v1059, %v1061
        %v1083 = vsel %vm1080, %v1063, %v1065
        %v1084 = vsel %vm1080, %v1065, %v1067
        %v1085 = vsel %vm1080, %v1069, %v1071
        %v1086 = vsel %vm1080, %v1071, %v1073
        %v1087 = vsel %vm1080, %v1075, %v1077
        %v1088 = vsel %vm1080, %v1077, %v1079
        %v1097 = vsel %vm616, %v1081, 0.0
        %v1098 = vsel %vm617, %v1082, 0.0
        %v1099 = vsel %vm616, %v1083, 0.0
        %v1100 = vsel %vm617, %v1084, 0.0
        %v1101 = vsel %vm616, %v1085, 0.0
        %v1102 = vsel %vm617, %v1086, 0.0
        %v1103 = vsel %vm616, %v1087, 0.0
        %v1104 = vsel %vm617, %v1088, 0.0
        %1105 = vrot.lane.b32.xlu0 %v832, 111
        %v1106 = vpop.permute.xlu0 %1105
        %1107 = vrot.lane.b32.xlu0 %v833, 111
        %v1108 = vpop.permute.xlu0 %1107
        %1109 = vrot.lane.b32.xlu0 %v834, 111
        %v1110 = vpop.permute.xlu0 %1109
        %1111 = vrot.lane.b32.xlu0 %v835, 111
        %v1112 = vpop.permute.xlu0 %1111
        %1113 = vrot.lane.b32.xlu0 %v836, 111
        %v1114 = vpop.permute.xlu0 %1113
        %1115 = vrot.lane.b32.xlu0 %v837, 111
        %v1116 = vpop.permute.xlu0 %1115
        %1117 = vrot.lane.b32.xlu0 %v838, 111
        %v1118 = vpop.permute.xlu0 %1117
        %1119 = vrot.lane.b32.xlu0 %v839, 111
        %v1120 = vpop.permute.xlu0 %1119
        %1121 = vrot.lane.b32.xlu0 %v840, 111
        %v1122 = vpop.permute.xlu0 %1121
        %1123 = vrot.lane.b32.xlu0 %v841, 111
        %v1124 = vpop.permute.xlu0 %1123
        %1125 = vrot.lane.b32.xlu0 %v842, 111
        %v1126 = vpop.permute.xlu0 %1125
        %1127 = vrot.lane.b32.xlu0 %v843, 111
        %v1128 = vpop.permute.xlu0 %1127
        %vm1129 = vcmask 908288
        %v1130 = vsel %vm1129, %v1106, %v1108
        %v1131 = vsel %vm1129, %v1108, %v1110
        %v1132 = vsel %vm1129, %v1112, %v1114
        %v1133 = vsel %vm1129, %v1114, %v1116
        %v1134 = vsel %vm1129, %v1118, %v1120
        %v1135 = vsel %vm1129, %v1120, %v1122
        %v1136 = vsel %vm1129, %v1124, %v1126
        %v1137 = vsel %vm1129, %v1126, %v1128
        %v1146 = vsel %vm618, %v1130, 0.0
        %v1147 = vsel %vm619, %v1131, 0.0
        %v1148 = vsel %vm618, %v1132, 0.0
        %v1149 = vsel %vm619, %v1133, 0.0
        %v1150 = vsel %vm618, %v1134, 0.0
        %v1151 = vsel %vm619, %v1135, 0.0
        %v1152 = vsel %vm618, %v1136, 0.0
        %v1153 = vsel %vm619, %v1137, 0.0
        %1154 = vrot.lane.b32.xlu0 %v832, 112
        %v1155 = vpop.permute.xlu0 %1154
        %1156 = vrot.lane.b32.xlu0 %v833, 112
        %v1157 = vpop.permute.xlu0 %1156
        %1158 = vrot.lane.b32.xlu0 %v834, 112
        %v1159 = vpop.permute.xlu0 %1158
        %1160 = vrot.lane.b32.xlu0 %v835, 112
        %v1161 = vpop.permute.xlu0 %1160
        %1162 = vrot.lane.b32.xlu0 %v836, 112
        %v1163 = vpop.permute.xlu0 %1162
        %1164 = vrot.lane.b32.xlu0 %v837, 112
        %v1165 = vpop.permute.xlu0 %1164
        %1166 = vrot.lane.b32.xlu0 %v838, 112
        %v1167 = vpop.permute.xlu0 %1166
        %1168 = vrot.lane.b32.xlu0 %v839, 112
        %v1169 = vpop.permute.xlu0 %1168
        %1170 = vrot.lane.b32.xlu0 %v840, 112
        %v1171 = vpop.permute.xlu0 %1170
        %1172 = vrot.lane.b32.xlu0 %v841, 112
        %v1173 = vpop.permute.xlu0 %1172
        %1174 = vrot.lane.b32.xlu0 %v842, 112
        %v1175 = vpop.permute.xlu0 %1174
        %1176 = vrot.lane.b32.xlu0 %v843, 112
        %v1177 = vpop.permute.xlu0 %1176
        %vm1178 = vcmask 916480
        %v1179 = vsel %vm1178, %v1155, %v1157
        %v1180 = vsel %vm1178, %v1157, %v1159
        %v1181 = vsel %vm1178, %v1161, %v1163
        %v1182 = vsel %vm1178, %v1163, %v1165
        %v1183 = vsel %vm1178, %v1167, %v1169
        %v1184 = vsel %vm1178, %v1169, %v1171
        %v1185 = vsel %vm1178, %v1173, %v1175
        %v1186 = vsel %vm1178, %v1175, %v1177
        %s1195 = scalar_lea.vmem %s7, 16
        %v1196 = vld [vmem:[%s1195] sm:$0xff]
        %v1198 = vsel %vm907, %v1196, 0
        %1200 = vmatprep.subr.mxu0 0.0
        %1201 = vmatpush1.msra.mxu0 0.0
        %1202 = vmatprep.subr.mxu0 0.0
        %1203 = vmatpush1.msra.mxu0 0.0
        %1204 = vmatprep.subr.mxu0 0.0
        %1205 = vmatpush1.msra.mxu0 0.0
        %1206 = vmatprep.subr.mxu0 0.0
        %1207 = vmatpush1.msra.mxu0 0.0
        %1208 = vmatprep.subr.mxu0 %v1153
        %1209 = vmatpush1.msra.mxu0 %v1152
        %1210 = vmatprep.subr.mxu0 %v1151
        %1211 = vmatpush1.msra.mxu0 %v1150
        %1212 = vmatprep.subr.mxu0 %v1149
        %1213 = vmatpush1.msra.mxu0 %v1148
        %1214 = vmatprep.subr.mxu0 %v1147
        %1215 = vmatpush1.msra.mxu0 %v1146
        %1216 = vmatprep.subr.mxu0 %v1186
        %1217 = vmatpush1.msra.mxu0 %v1185
        %1218 = vmatprep.subr.mxu0 %v1184
        %1219 = vmatpush1.msra.mxu0 %v1183
        %1220 = vmatprep.subr.mxu0 %v1182
        %1221 = vmatpush1.msra.mxu0 %v1181
        %1222 = vmatprep.subr.mxu0 %v1180
        %1223 = vmatpush1.msra.mxu0 %v1179
        %1224 = vmatprep.subr.mxu0 %v1104
        %1225 = vmatpush1.msra.mxu0 %v1103
        %1226 = vmatprep.subr.mxu0 %v1102
        %1227 = vmatpush1.msra.mxu0 %v1101
        %1228 = vmatprep.subr.mxu0 %v1100
        %1229 = vmatpush1.msra.mxu0 %v1099
        %1230 = vmatprep.subr.mxu0 %v1098
        %1231 = vmatpush1.msra.mxu0 %v1097
        %1232 = vmatprep.subr.mxu0 0.0
        %1233 = vmatpush2.msra.mxu0 0.0
        %1234 = vmatprep.subr.mxu0 0.0
        %1235 = vmatpush2.msra.mxu0 0.0
        %1236 = vmatprep.subr.mxu0 0.0
        %1237 = vmatpush2.msra.mxu0 0.0
        %1238 = vmatprep.subr.mxu0 0.0
        %1239 = vmatpush2.msra.mxu0 0.0
        %1240 = vmatprep.subr.mxu0 0.0
        %1241 = vmatpush2.msra.mxu0 0.0
        %1242 = vmatprep.subr.mxu0 0.0
        %1243 = vmatpush2.msra.mxu0 0.0
        %1244 = vmatprep.subr.mxu0 0.0
        %1245 = vmatpush2.msra.mxu0 0.0
        %1246 = vmatprep.subr.mxu0 0.0
        %1247 = vmatpush2.msra.mxu0 0.0
        %1248 = vmatprep.subr.mxu0 0.0
        %1249 = vmatpush2.msra.mxu0 0.0
        %1250 = vmatprep.subr.mxu0 0.0
        %1251 = vmatpush2.msra.mxu0 0.0
        %1252 = vmatprep.subr.mxu0 0.0
        %1253 = vmatpush2.msra.mxu0 0.0
        %1254 = vmatprep.subr.mxu0 0.0
        %1255 = vmatpush2.msra.mxu0 0.0
        %1256 = vmatprep.subr.mxu0 0.0
        %1257 = vmatpush2.msra.mxu0 0.0
        %1258 = vmatprep.subr.mxu0 0.0
        %1259 = vmatpush2.msra.mxu0 0.0
        %1260 = vmatprep.subr.mxu0 0.0
        %1261 = vmatpush2.msra.mxu0 0.0
        %1262 = vmatprep.subr.mxu0 0.0
        %1263 = vmatpush2.msra.mxu0 0.0
        %1264 = vmatprep.mubr.f32.mxu0 0.0
        %1265 = vmatmul.mubr.f32.gmra.mxu0 %v1198
        %v1266 = vpop.f32.mrf.mxu0
        %v1267 = vadd.f32 0.0, %v1266
        %v1268 = vpop.f32.mrf.mxu0
        %v1269 = vadd.f32 0.0, %v1268
        %1270 = vdwg.mxu0
        %v1271 = vadd.f32 %v1052, %v1267
        %v1272 = vadd.f32 %v1054, %v1269
        %v1273 = vld [vmem:[%s8] sm:$0xff]
        %1275 = vset.pattern.permute.xlu0 0
        %1276 = vperm.xlu0 %1275, %v1273
        %v1277 = vpop.permute.xlu0 %1276
        %v1279 = vadd.f32 %v1271, %v1277
        %v1280 = vadd.f32 %v1272, %v1277
        %1281 = vst [vmem:[%s325] sm:$0xff] %v1279
        %1282 = vst [vmem:[%s325 + $0x8] sm:$0xff] %v1280
        %1283 = vst [vmem:[%s325 + $0x10] sm:$0xff] %v331
        %1284 = vst [vmem:[%s325 + $0x18] sm:$0xff] %v332
        %1285 = vst [vmem:[%s325 + $0x20] sm:$0xff] %v333
        %1286 = vst [vmem:[%s325 + $0x28] sm:$0xff] %v334
        %s1287 = sand.u32 %s225, 1
        %s1288 = scalar_lea.sflag [#allocation4], %s1287
        %s1289 = sand.u32 %s225, 1
        %s1290 = smul.addr %s1289, 48
        %s1291 = scalar_lea.vmem [#allocation3], %s1290
        // Predicated region
        $region57: #{tpu_custom_call.1} parent=55 // pred_check
          %p1292 = pneg %p235
        $region58: #{tpu_custom_call.1} parent=55 // pred_check_branch
          %1294 = sbr.rel (%p1292) target = $region60
        $region59: #{tpu_custom_call.1} parent=55 // pred_region
          %s1296 = ssub.s32 768, 768
          %1297 = vsyncadd %s1288, %s1296
          %s1298 = smul.addr %s23, 6
          %s1299 = smul.addr %s1298, 128
          %s1300 = scalar_lea.hbm %s9, %s1299
          %s1301 = sshll.u32 %s1291, 4
          %s1302 = int_to_ptr.vmem [resolvable:$true] %s1301
          %1307 = dma.vmem_to_hbm [thread:$0]  %s1302, 768, %s1300, %s1288, 256, 256, 16
        $region60: #{tpu_custom_call.1} parent=55 // pred_fallthru
          _
      $region56: #{tpu_custom_call.1} parent=5 // pred_fallthru
        _
      %p1308 = scmp.le.s32.totalorder 2, %s18
      // Predicated region
      $region61: #{tpu_custom_call.1} parent=5 // pred_check
        %p1309 = pneg %p1308
      $region62: #{tpu_custom_call.1} parent=5 // pred_check_branch
        %1311 = sbr.rel (%p1309) target = $region64
      $region63: #{tpu_custom_call.1} parent=5 // pred_region
        %s1312 = ssub.s32 %s18, 2
        // Predicated region
        $region65: #{tpu_custom_call.1} parent=63 // pred_check
          %p1313 = pneg %p241
        $region66: #{tpu_custom_call.1} parent=63 // pred_check_branch
          %1315 = sbr.rel (%p1313) target = $region68
        $region67: #{tpu_custom_call.1} parent=63 // pred_region
          %s1316 = sand.u32 %s226, 1
          %s1317 = scalar_lea.sflag [#allocation4], %s1316
          %s1318 = sand.u32 %s226, 1
          %s1319 = smul.addr %s1318, 48
          %s1320 = scalar_lea.vmem [#allocation3], %s1319
          %1321 = dma.done %s1317, 768
        $region68: #{tpu_custom_call.1} parent=63 // pred_fallthru
          _
      $region64: #{tpu_custom_call.1} parent=5 // pred_fallthru
        _
    $region6: #{tpu_custom_call.1} parent=1 // loop_footer
      %s22 = sadd.s32 1, %s18
    $region7: #{tpu_custom_call.1} parent=1 // loop_footer_branch
      %17 = sbr.rel target = $region3
    $region8: #{tpu_custom_call.1} parent=1 // loop_exit
      _
    %1322 = vsyncpa [#allocation4], 1
    %s1323 = scalar_lea.sflag [#allocation4], 1
    %1324 = vsyncpa %s1323, 1

</llo_original>
